<compile_context>
chip_gen: v7x
topology: tpu7x:2x2x1
jax: 0.10.0
libtpu: 0.0.40
codegen_flags: <defaults>
</compile_context>

<pallas_src>
import functools

import jax
import jax.numpy as jnp
from jax.experimental import pallas as pl
from jax.experimental.pallas import tpu as pltpu


LANE = 128
SUBLANE = 8
MAX_BLOCK_B = 128


def _round_up(n, m):
    return ((n + m - 1) // m) * m


def actor_kernel(x_ref, w1_ref, b1_ref, w2_ref, b2_ref, w3_ref, bsm_ref, o_ref):
    # Fused MLP hot path on one (block_b, *) batch tile.
    x = x_ref[...]                                                   # bf16 (bb, S)

    h1 = jnp.dot(x, w1_ref[...], preferred_element_type=jnp.float32)
    h1 = jnp.maximum(h1 + b1_ref[...], 0.0)                          # f32
    h1 = h1.astype(jnp.bfloat16)

    h2 = jnp.dot(h1, w2_ref[...], preferred_element_type=jnp.float32)
    h2 = jnp.maximum(h2 + b2_ref[...], 0.0)                          # f32
    h2 = h2.astype(jnp.bfloat16)

    z = jnp.dot(h2, w3_ref[...], preferred_element_type=jnp.float32)

    b3 = bsm_ref[0:1, :]                                             # (1, A_pad) f32
    scale = bsm_ref[1:2, :]
    mid = bsm_ref[2:3, :]

    a = jnp.tanh(z + b3)                                             # EUP
    o_ref[...] = a * scale + mid


@functools.partial(jax.jit, static_argnames=("num_actions",))
def actor_forward(x, padded_params, num_actions):
    """x: [B, num_states] float32.  Returns [B, num_actions] float32."""
    w1, b1, w2, b2, w3, bsm = padded_params
    B, S = x.shape
    H1 = w1.shape[1]          # padded (multiple of 128)
    H2 = w2.shape[1]          # padded
    Ap = w3.shape[1]          # padded (>= num_actions, multiple of 128)

    # Batch tiling: small batches -> one full-batch tile (padded to sublane
    # granularity); large batches -> 128-row tiles on a parallel grid axis.
    if B <= MAX_BLOCK_B:
        Bp = _round_up(B, SUBLANE)
        block_b = Bp
    else:
        Bp = _round_up(B, MAX_BLOCK_B)
        block_b = MAX_BLOCK_B

    xb = x.astype(jnp.bfloat16)
    if Bp != B:
        xb = jnp.pad(xb, ((0, Bp - B), (0, 0)))   # zero rows: exact, sliced off

    grid = (Bp // block_b,)
    full = lambda i: (0, 0)   # weights / packed small tensors: same block every step

    out = pl.pallas_call(
        actor_kernel,
        out_shape=jax.ShapeDtypeStruct((Bp, Ap), jnp.float32),
        grid_spec=pltpu.PrefetchScalarGridSpec(
            num_scalar_prefetch=0,
            grid=grid,
            in_specs=[
                pl.BlockSpec((block_b, S), lambda i: (i, 0)),   # x tile (bf16)
                pl.BlockSpec((S, H1), full),                    # W1 (bf16)
                pl.BlockSpec((1, H1), full),                    # b1 (f32)
                pl.BlockSpec((H1, H2), full),                   # W2 (bf16)
                pl.BlockSpec((1, H2), full),                    # b2 (f32)
                pl.BlockSpec((H2, Ap), full),                   # W3 (bf16)
                pl.BlockSpec((3, Ap), full),                    # [b3; scale; mid] (f32)
            ],
            out_specs=pl.BlockSpec((block_b, Ap), lambda i: (i, 0)),
        ),
        compiler_params=pltpu.CompilerParams(
            dimension_semantics=("parallel",),
        ),
    )(xb, w1, b1, w2, b2, w3, bsm)

    return out[:B, :num_actions]


def init_actor_params(key, num_states, num_actions, hidden_dims=(400, 300)):
    """Deterministic synthetic weights (PyTorch Linear default-style uniform).
    Weights stored as [in, out] so the kernel does x @ W directly."""
    dims = [num_states, *hidden_dims, num_actions]
    params = []
    for i in range(len(dims) - 1):
        key, kw, kb = jax.random.split(key, 3)
        bound = 1.0 / jnp.sqrt(dims[i])
        w = jax.random.uniform(kw, (dims[i], dims[i + 1]), jnp.float32, -bound, bound)
        b = jax.random.uniform(kb, (1, dims[i + 1]), jnp.float32, -bound, bound)
        params += [w, b]
    return tuple(params)


def prepare_padded_params(params, low, high):
    """Zero-pad feature dims to 128-lane multiples, cast weights to bf16, and
    pack b3/scale/mid into one (3, A_pad) f32 array.  Zero padding is exact:
    ReLU(0)=0 and the padded action lanes are sliced off by the wrapper."""
    w1, b1, w2, b2, w3, b3 = params
    S, H1 = w1.shape
    H2 = w2.shape[1]
    A = w3.shape[1]
    H1p, H2p, Ap = _round_up(H1, LANE), _round_up(H2, LANE), _round_up(A, LANE)

    def pad2(a, rows, cols):
        return jnp.pad(a, ((0, rows - a.shape[0]), (0, cols - a.shape[1])))

    w1p = pad2(w1, S, H1p).astype(jnp.bfloat16)
    b1p = pad2(b1, 1, H1p)                                  # f32
    w2p = pad2(w2, H1p, H2p).astype(jnp.bfloat16)
    b2p = pad2(b2, 1, H2p)                                  # f32
    w3p = pad2(w3, H2p, Ap).astype(jnp.bfloat16)

    mid = (low + high) * 0.5
    scale = jnp.abs(high - low) * 0.5
    bsm = jnp.concatenate(
        [pad2(b3, 1, Ap), pad2(scale, 1, Ap), pad2(mid, 1, Ap)], axis=0
    )                                                       # (3, Ap) f32

    return (w1p, b1p, w2p, b2p, w3p, bsm)


def reference_forward(x, params, low, high):
    w1, b1, w2, b2, w3, b3 = params
    h1 = jnp.maximum(x @ w1 + b1, 0.0)
    h2 = jnp.maximum(h1 @ w2 + b2, 0.0)
    a = jnp.tanh(h2 @ w3 + b3)
    mid = (low + high) * 0.5
    scale = jnp.abs(high - low) * 0.5
    return a * scale + mid


if __name__ == "__main__":
    # Small, module-consistent shapes: RL-style minibatch, default hidden dims.
    batch = 64
    num_states = 16
    num_actions = 4
    hidden_dims = (400, 300)   # module defaults

    key = jax.random.PRNGKey(0)
    key, kx = jax.random.split(key)
    x = jax.random.normal(kx, (batch, num_states), jnp.float32)

    params = init_actor_params(key, num_states, num_actions, hidden_dims)

    # Synthetic action space (e.g. continuous control with bounds [-2, 2]).
    low = -2.0 * jnp.ones((1, num_actions), jnp.float32)
    high = 2.0 * jnp.ones((1, num_actions), jnp.float32)

    padded_params = prepare_padded_params(params, low, high)

    out = actor_forward(x, padded_params, num_actions)
    out = jax.block_until_ready(out)

    ref = reference_forward(x, params, low, high)
    assert out.shape == (batch, num_actions)
    # bf16 matmul inputs (f32 accumulation) vs pure-f32 reference: loose tol.
    assert jnp.allclose(out, ref, atol=5e-2, rtol=5e-2), float(
        jnp.max(jnp.abs(out - ref)))

    print("KERNEL_OK")
</pallas_src>

<mosaic_0001>
module attributes {stable_mosaic.version = 11 : i64} {
  func.func @actor_kernel(%arg0: i32, %arg1: memref<64x16xbf16, #tpu.memory_space<vmem>>, %arg2: memref<16x512xbf16, #tpu.memory_space<vmem>>, %arg3: memref<1x512xf32, #tpu.memory_space<vmem>>, %arg4: memref<512x384xbf16, #tpu.memory_space<vmem>>, %arg5: memref<1x384xf32, #tpu.memory_space<vmem>>, %arg6: memref<384x128xbf16, #tpu.memory_space<vmem>>, %arg7: memref<3x128xf32, #tpu.memory_space<vmem>>, %arg8: memref<64x128xf32, #tpu.memory_space<vmem>>) attributes {dimension_semantics = [#tpu.dimension_semantics<parallel>], iteration_bounds = array<i64: 1>, scalar_prefetch = 0 : i64, scratch_operands = 0 : i64, tpu.core_type = #tpu.core_type<tc>, window_params = [{transform_indices = @transform_0, window_bounds = array<i64: 64, 16>}, {pipeline_mode = #tpu.pipeline_mode<synchronous>, transform_indices = @transform_1, window_bounds = array<i64: 16, 512>}, {pipeline_mode = #tpu.pipeline_mode<synchronous>, transform_indices = @transform_2, window_bounds = array<i64: 1, 512>}, {pipeline_mode = #tpu.pipeline_mode<synchronous>, transform_indices = @transform_3, window_bounds = array<i64: 512, 384>}, {pipeline_mode = #tpu.pipeline_mode<synchronous>, transform_indices = @transform_4, window_bounds = array<i64: 1, 384>}, {pipeline_mode = #tpu.pipeline_mode<synchronous>, transform_indices = @transform_5, window_bounds = array<i64: 384, 128>}, {pipeline_mode = #tpu.pipeline_mode<synchronous>, transform_indices = @transform_6, window_bounds = array<i64: 3, 128>}, {transform_indices = @transform_7, window_bounds = array<i64: 64, 128>}]} {
    %c0 = arith.constant 0 : index
    %c0_0 = arith.constant 0 : index
    %0 = vector.load %arg1[%c0, %c0_0] : memref<64x16xbf16, #tpu.memory_space<vmem>>, vector<64x16xbf16>
    %c0_1 = arith.constant 0 : index
    %c0_2 = arith.constant 0 : index
    %1 = vector.load %arg2[%c0_1, %c0_2] : memref<16x512xbf16, #tpu.memory_space<vmem>>, vector<16x512xbf16>
    %cst = arith.constant dense<0.000000e+00> : vector<64x512xf32>
    %2 = tpu.matmul %0, %1, %cst {dimension_numbers = #tpu.dot_dimension_numbers<[1], [0], [0], [1], [0, 0, 1, 1], [], []>} : vector<64x16xbf16>, vector<16x512xbf16>, vector<64x512xf32> -> vector<64x512xf32>
    %c0_3 = arith.constant 0 : index
    %c0_4 = arith.constant 0 : index
    %3 = vector.load %arg3[%c0_3, %c0_4] : memref<1x512xf32, #tpu.memory_space<vmem>>, vector<1x512xf32>
    %4 = vector.broadcast %3 : vector<1x512xf32> to vector<64x512xf32>
    %5 = arith.addf %2, %4 : vector<64x512xf32>
    %cst_5 = arith.constant 0.000000e+00 : f32
    %6 = vector.broadcast %cst_5 : f32 to vector<64x512xf32>
    %7 = arith.maximumf %5, %6 : vector<64x512xf32>
    %8 = arith.truncf %7 : vector<64x512xf32> to vector<64x512xbf16>
    %c0_6 = arith.constant 0 : index
    %c0_7 = arith.constant 0 : index
    %9 = vector.load %arg4[%c0_6, %c0_7] : memref<512x384xbf16, #tpu.memory_space<vmem>>, vector<512x384xbf16>
    %cst_8 = arith.constant dense<0.000000e+00> : vector<64x384xf32>
    %10 = tpu.matmul %8, %9, %cst_8 {dimension_numbers = #tpu.dot_dimension_numbers<[1], [0], [0], [1], [0, 0, 1, 1], [], []>} : vector<64x512xbf16>, vector<512x384xbf16>, vector<64x384xf32> -> vector<64x384xf32>
    %c0_9 = arith.constant 0 : index
    %c0_10 = arith.constant 0 : index
    %11 = vector.load %arg5[%c0_9, %c0_10] : memref<1x384xf32, #tpu.memory_space<vmem>>, vector<1x384xf32>
    %12 = vector.broadcast %11 : vector<1x384xf32> to vector<64x384xf32>
    %13 = arith.addf %10, %12 : vector<64x384xf32>
    %cst_11 = arith.constant 0.000000e+00 : f32
    %14 = vector.broadcast %cst_11 : f32 to vector<64x384xf32>
    %15 = arith.maximumf %13, %14 : vector<64x384xf32>
    %16 = arith.truncf %15 : vector<64x384xf32> to vector<64x384xbf16>
    %c0_12 = arith.constant 0 : index
    %c0_13 = arith.constant 0 : index
    %17 = vector.load %arg6[%c0_12, %c0_13] : memref<384x128xbf16, #tpu.memory_space<vmem>>, vector<384x128xbf16>
    %cst_14 = arith.constant dense<0.000000e+00> : vector<64x128xf32>
    %18 = tpu.matmul %16, %17, %cst_14 {dimension_numbers = #tpu.dot_dimension_numbers<[1], [0], [0], [1], [0, 0, 1, 1], [], []>} : vector<64x384xbf16>, vector<384x128xbf16>, vector<64x128xf32> -> vector<64x128xf32>
    %c0_15 = arith.constant 0 : index
    %c0_16 = arith.constant 0 : index
    %19 = vector.load %arg7[%c0_15, %c0_16] : memref<3x128xf32, #tpu.memory_space<vmem>>, vector<1x128xf32>
    %c1 = arith.constant 1 : index
    %c0_17 = arith.constant 0 : index
    %20 = vector.load %arg7[%c1, %c0_17] : memref<3x128xf32, #tpu.memory_space<vmem>>, vector<1x128xf32>
    %c2 = arith.constant 2 : index
    %c0_18 = arith.constant 0 : index
    %21 = vector.load %arg7[%c2, %c0_18] : memref<3x128xf32, #tpu.memory_space<vmem>>, vector<1x128xf32>
    %22 = vector.broadcast %19 : vector<1x128xf32> to vector<64x128xf32>
    %23 = arith.addf %18, %22 : vector<64x128xf32>
    %24 = math.tanh %23 : vector<64x128xf32>
    %25 = vector.broadcast %20 : vector<1x128xf32> to vector<64x128xf32>
    %26 = arith.mulf %24, %25 : vector<64x128xf32>
    %27 = vector.broadcast %21 : vector<1x128xf32> to vector<64x128xf32>
    %28 = arith.addf %26, %27 : vector<64x128xf32>
    %c0_19 = arith.constant 0 : index
    %c0_20 = arith.constant 0 : index
    %29 = vector.load %arg8[%c0_19, %c0_20] : memref<64x128xf32, #tpu.memory_space<vmem>>, vector<64x128xf32>
    tpu.vector_store %arg8[%c0_19, %c0_20], %28 {strides = array<i32>} : memref<64x128xf32, #tpu.memory_space<vmem>>, vector<64x128xf32>,
    return
  }
  func.func @transform_0(%arg0: i32) -> (i32, i32) {
    %c0_i32 = arith.constant 0 : i32
    %c0_i32_0 = arith.constant 0 : i32
    return %arg0, %c0_i32 : i32, i32
  }
  func.func @transform_1(%arg0: i32) -> (i32, i32) {
    %c0_i32 = arith.constant 0 : i32
    %c0_i32_0 = arith.constant 0 : i32
    %c0_i32_1 = arith.constant 0 : i32
    return %c0_i32, %c0_i32_0 : i32, i32
  }
  func.func @transform_2(%arg0: i32) -> (i32, i32) {
    %c0_i32 = arith.constant 0 : i32
    %c0_i32_0 = arith.constant 0 : i32
    %c0_i32_1 = arith.constant 0 : i32
    return %c0_i32, %c0_i32_0 : i32, i32
  }
  func.func @transform_3(%arg0: i32) -> (i32, i32) {
    %c0_i32 = arith.constant 0 : i32
    %c0_i32_0 = arith.constant 0 : i32
    %c0_i32_1 = arith.constant 0 : i32
    return %c0_i32, %c0_i32_0 : i32, i32
  }
  func.func @transform_4(%arg0: i32) -> (i32, i32) {
    %c0_i32 = arith.constant 0 : i32
    %c0_i32_0 = arith.constant 0 : i32
    %c0_i32_1 = arith.constant 0 : i32
    return %c0_i32, %c0_i32_0 : i32, i32
  }
  func.func @transform_5(%arg0: i32) -> (i32, i32) {
    %c0_i32 = arith.constant 0 : i32
    %c0_i32_0 = arith.constant 0 : i32
    %c0_i32_1 = arith.constant 0 : i32
    return %c0_i32, %c0_i32_0 : i32, i32
  }
  func.func @transform_6(%arg0: i32) -> (i32, i32) {
    %c0_i32 = arith.constant 0 : i32
    %c0_i32_0 = arith.constant 0 : i32
    %c0_i32_1 = arith.constant 0 : i32
    return %c0_i32, %c0_i32_0 : i32, i32
  }
  func.func @transform_7(%arg0: i32) -> (i32, i32) {
    %c0_i32 = arith.constant 0 : i32
    %c0_i32_0 = arith.constant 0 : i32
    return %arg0, %c0_i32 : i32, i32
  }
}

</mosaic_0001>

<llo_original>
// kernel: actor_forward.1
$region0: #{actor_forward.1}
  #allocation0 [shape = 'u32[]', space=smem, size = 0x4, offset = 0x4, fixed_abs, tag = 'smem constant byte address 0x4 - core index']
  #allocation1 [shape = 'u32[144,128]{1,0:T(1,128)}', space=vmem, size = 0x12000, scoped, tag = 'internal scratch']
  %s0 = inlined_call_operand.vmem [shape: bf16[64,16], index: 0, kind: input, shape index: {}]
  %s1 = inlined_call_operand.vmem [shape: bf16[16,512], index: 1, kind: input, shape index: {}]
  %s2 = inlined_call_operand.vmem [shape: f32[1,512], index: 2, kind: input, shape index: {}]
  %s3 = inlined_call_operand.hbm [shape: bf16[512,384], index: 3, kind: input, shape index: {}]
  %s4 = inlined_call_operand.vmem [shape: f32[1,384], index: 4, kind: input, shape index: {}]
  %s5 = inlined_call_operand.hbm [shape: bf16[384,128], index: 5, kind: input, shape index: {}]
  %s6 = inlined_call_operand.vmem [shape: f32[3,128], index: 6, kind: input, shape index: {}]
  %s7 = inlined_call_operand.vmem [shape: f32[64,128], index: 7, kind: output, shape index: {}]
  %s8 = sld [smem:[#allocation0]]
  $region46: #{actor_forward.1} parent=0
    _
  %s10 = ssub.s32 1, %s8
  %s11 = scalar_select 0, %s10, %s8
  $region1: #{actor_forward.1} parent=0
    #allocation2 [shape = 'u8[393216]{0}', space=vmem, size = 0x60000, scoped, tag = 'input window, operand 3, single buffered']
    #allocation3 [shape = 's32[1]{0}', space=sflag, size = 0x4, scoped, tag = 'scoped memory for actor_forward.1']
    #allocation4 [shape = 'u8[98304]{0}', space=vmem, size = 0x18000, scoped, tag = 'input window, operand 5, single buffered']
    #allocation5 [shape = 's32[1]{0}', space=sflag, size = 0x4, scoped, tag = 'scoped memory for actor_forward.1']
    %12 = vsyncpa [#allocation3], 0
    %13 = vsyncpa [#allocation5], 0
    // Predicated region
    $region2: #{actor_forward.1} parent=1 // pred_check
      _
    $region3: #{actor_forward.1} parent=1 // pred_check_branch
      %15 = sbr.rel (0) target = $region5
    $region4: #{actor_forward.1} parent=1 // pred_region
      _
    $region5: #{actor_forward.1} parent=1 // pred_fallthru
      _
    // Predicated region
    $region6: #{actor_forward.1} parent=1 // pred_check
      _
    $region7: #{actor_forward.1} parent=1 // pred_check_branch
      %17 = sbr.rel (0) target = $region9
    $region8: #{actor_forward.1} parent=1 // pred_region
      _
    $region9: #{actor_forward.1} parent=1 // pred_fallthru
      _
    // Predicated region
    $region10: #{actor_forward.1} parent=1 // pred_check
      _
    $region11: #{actor_forward.1} parent=1 // pred_check_branch
      %19 = sbr.rel (0) target = $region13
    $region12: #{actor_forward.1} parent=1 // pred_region
      _
    $region13: #{actor_forward.1} parent=1 // pred_fallthru
      _
    // Predicated region
    $region14: #{actor_forward.1} parent=1 // pred_check
      _
    $region15: #{actor_forward.1} parent=1 // pred_check_branch
      %21 = sbr.rel (0) target = $region17
    $region16: #{actor_forward.1} parent=1 // pred_region
      %s23 = ssub.s32 12288, 12288
      %24 = vsyncadd [#allocation3], %s23
      %s25 = sshll.u32 [#allocation2], 4
      %s26 = int_to_ptr.vmem [resolvable:$true] %s25
      %31 = dma.hbm_to_vmem [thread:$0]  %s3, 12288, %s26, [#allocation3], 192, 192, 12
    $region17: #{actor_forward.1} parent=1 // pred_fallthru
      _
    // Predicated region
    $region18: #{actor_forward.1} parent=1 // pred_check
      _
    $region19: #{actor_forward.1} parent=1 // pred_check_branch
      %33 = sbr.rel (0) target = $region21
    $region20: #{actor_forward.1} parent=1 // pred_region
      _
    $region21: #{actor_forward.1} parent=1 // pred_fallthru
      _
    // Predicated region
    $region22: #{actor_forward.1} parent=1 // pred_check
      _
    $region23: #{actor_forward.1} parent=1 // pred_check_branch
      %35 = sbr.rel (0) target = $region25
    $region24: #{actor_forward.1} parent=1 // pred_region
      %s37 = ssub.s32 3072, 3072
      %38 = vsyncadd [#allocation5], %s37
      %s39 = sshll.u32 [#allocation4], 4
      %s40 = int_to_ptr.vmem [resolvable:$true] %s39
      %45 = dma.hbm_to_vmem [thread:$0]  %s5, 3072, %s40, [#allocation5], 64, 64, 4
    $region25: #{actor_forward.1} parent=1 // pred_fallthru
      _
    // Predicated region
    $region26: #{actor_forward.1} parent=1 // pred_check
      _
    $region27: #{actor_forward.1} parent=1 // pred_check_branch
      %47 = sbr.rel (0) target = $region29
    $region28: #{actor_forward.1} parent=1 // pred_region
      _
    $region29: #{actor_forward.1} parent=1 // pred_fallthru
      _
    // Predicated region
    $region30: #{actor_forward.1} parent=1 // pred_check
      _
    $region31: #{actor_forward.1} parent=1 // pred_check_branch
      %49 = sbr.rel (0) target = $region33
    $region32: #{actor_forward.1} parent=1 // pred_region
      %50 = dma.done [#allocation3], 12288
    $region33: #{actor_forward.1} parent=1 // pred_fallthru
      _
    // Predicated region
    $region34: #{actor_forward.1} parent=1 // pred_check
      _
    $region35: #{actor_forward.1} parent=1 // pred_check_branch
      %52 = sbr.rel (0) target = $region37
    $region36: #{actor_forward.1} parent=1 // pred_region
      %53 = dma.done [#allocation5], 3072
    $region37: #{actor_forward.1} parent=1 // pred_fallthru
      _
    %v55 = vld [vmem:[%s0] sm:$0xf]
    %v56 = vld [vmem:[%s0 + $0x4] sm:$0xf]
    %v57 = vld [vmem:[%s0 + $0x8] sm:$0xf]
    %v58 = vld [vmem:[%s0 + $0xc] sm:$0xf]
    %v59 = vld [vmem:[%s0 + $0x10] sm:$0xf]
    %v60 = vld [vmem:[%s0 + $0x14] sm:$0xf]
    %v61 = vld [vmem:[%s0 + $0x18] sm:$0xf]
    %v62 = vld [vmem:[%s0 + $0x1c] sm:$0xf]
    %v63 = vld [vmem:[%s1] sm:$0xff]
    %v64 = vld [vmem:[%s1 + $0x8] sm:$0xff]
    %v65 = vld [vmem:[%s1 + $0x10] sm:$0xff]
    %v66 = vld [vmem:[%s1 + $0x18] sm:$0xff]
    %v67 = vld [vmem:[%s2] sm:$0xf]
    %v69 = vlaneseq
    %v70 = vshrl.u32 %v69, 7
    %v71 = vsub.s32 0, %v70
    %v72 = vrot.slane %v67, %v71
    %v73 = vlaneseq
    %v74 = vshrl.u32 %v73, 7
    %v75 = vsub.s32 1, %v74
    %v76 = vrot.slane %v67, %v75
    %v77 = vlaneseq
    %v78 = vshrl.u32 %v77, 7
    %v79 = vsub.s32 2, %v78
    %v80 = vrot.slane %v67, %v79
    %v81 = vlaneseq
    %v82 = vshrl.u32 %v81, 7
    %v83 = vsub.s32 3, %v82
    %v84 = vrot.slane %v67, %v83
    %v97 = vunpack.c.l.b16 %v55
    %v98 = vunpack.c.l.b16 %v56
    %v99 = vunpack.c.l.b16 %v57
    %v100 = vunpack.c.l.b16 %v58
    %v101 = vunpack.c.l.b16 %v59
    %v102 = vunpack.c.l.b16 %v60
    %v103 = vunpack.c.l.b16 %v61
    %v104 = vunpack.c.l.b16 %v62
    %v105 = vpack.c.b16 %v98, %v97
    %v106 = vpack.c.b16 %v100, %v99
    %v107 = vpack.c.b16 %v102, %v101
    %v108 = vpack.c.b16 %v104, %v103
    %v113 = vunpack.c.l.b16 %v63
    %v114 = vunpack.c.h.b16 %v63
    %v115 = vunpack.c.l.b16 %v64
    %v116 = vunpack.c.h.b16 %v64
    %v117 = vunpack.c.l.b16 %v65
    %v118 = vunpack.c.h.b16 %v65
    %v119 = vunpack.c.l.b16 %v66
    %v120 = vunpack.c.h.b16 %v66
    %v121 = vpack.c.b16 %v117, %v113
    %v122 = vpack.c.b16 %v118, %v114
    %v123 = vpack.c.b16 %v119, %v115
    %v124 = vpack.c.b16 %v120, %v116
    %vm129 = vcmask 130048
    %v131 = vsel %vm129, %v105, 0
    %v134 = vsel %vm129, %v106, 0
    %v137 = vsel %vm129, %v107, 0
    %v140 = vsel %vm129, %v108, 0
    %142 = vmatprep.subr.bf16.mxu0 %v122
    %143 = vmatpush1.bf16.msra.mxu0 %v121
    %144 = vmatprep.subr.bf16.mxu0 0
    %145 = vmatpush1.bf16.msra.mxu0 0
    %146 = vmatprep.subr.bf16.mxu0 0
    %147 = vmatpush1.bf16.msra.mxu0 0
    %148 = vmatprep.subr.bf16.mxu0 0
    %149 = vmatpush1.bf16.msra.mxu0 0
    %150 = vmatprep.subr.bf16.mxu0 0
    %151 = vmatpush1.bf16.msra.mxu0 0
    %152 = vmatprep.subr.bf16.mxu0 0
    %153 = vmatpush1.bf16.msra.mxu0 0
    %154 = vmatprep.subr.bf16.mxu0 0
    %155 = vmatpush1.bf16.msra.mxu0 0
    %156 = vmatprep.subr.bf16.mxu0 0
    %157 = vmatpush1.bf16.msra.mxu0 0
    %158 = vmatprep.subr.bf16.mxu0 0
    %159 = vmatpush1.bf16.msra.mxu0 0
    %160 = vmatprep.subr.bf16.mxu0 0
    %161 = vmatpush1.bf16.msra.mxu0 0
    %162 = vmatprep.subr.bf16.mxu0 0
    %163 = vmatpush1.bf16.msra.mxu0 0
    %164 = vmatprep.subr.bf16.mxu0 0
    %165 = vmatpush1.bf16.msra.mxu0 0
    %166 = vmatprep.subr.bf16.mxu0 0
    %167 = vmatpush1.bf16.msra.mxu0 0
    %168 = vmatprep.subr.bf16.mxu0 0
    %169 = vmatpush1.bf16.msra.mxu0 0
    %170 = vmatprep.subr.bf16.mxu0 0
    %171 = vmatpush1.bf16.msra.mxu0 0
    %172 = vmatprep.subr.bf16.mxu0 0
    %173 = vmatpush1.bf16.msra.mxu0 0
    %174 = vmatprep.mubr.bf16.mxu0 0
    %175 = vmatmul.mubr.bf16.gmra.mrb[0].mxu0 %v131
    %v176 = vpop.f32.mrb[0].mxu0
    %v177 = vadd.f32 %v72, %v176
    %v178 = vpop.f32.mrb[0].mxu0
    %v179 = vadd.f32 %v76, %v178
    %v180 = vpop.f32.mrb[0].mxu0
    %v181 = vadd.f32 %v72, %v180
    %v182 = vpop.f32.mrb[0].mxu0
    %v183 = vadd.f32 %v76, %v182
    %184 = vmatprep.mubr.bf16.mxu0 0
    %185 = vmatmul.mubr.bf16.gmra.mrb[0].mxu0 %v134
    %v186 = vpop.f32.mrb[0].mxu0
    %v187 = vadd.f32 %v72, %v186
    %v188 = vpop.f32.mrb[0].mxu0
    %v189 = vadd.f32 %v76, %v188
    %v190 = vpop.f32.mrb[0].mxu0
    %v191 = vadd.f32 %v72, %v190
    %v192 = vpop.f32.mrb[0].mxu0
    %v193 = vadd.f32 %v76, %v192
    %194 = vmatprep.mubr.bf16.mxu0 0
    %195 = vmatmul.mubr.bf16.gmra.mrb[0].mxu0 %v137
    %v196 = vpop.f32.mrb[0].mxu0
    %v197 = vadd.f32 %v72, %v196
    %v198 = vpop.f32.mrb[0].mxu0
    %v199 = vadd.f32 %v76, %v198
    %v200 = vpop.f32.mrb[0].mxu0
    %v201 = vadd.f32 %v72, %v200
    %v202 = vpop.f32.mrb[0].mxu0
    %v203 = vadd.f32 %v76, %v202
    %204 = vmatprep.mubr.bf16.mxu0 0
    %205 = vmatmul.mubr.bf16.gmra.mrb[0].mxu0 %v140
    %v206 = vpop.f32.mrb[0].mxu0
    %v207 = vadd.f32 %v72, %v206
    %v208 = vpop.f32.mrb[0].mxu0
    %v209 = vadd.f32 %v76, %v208
    %v210 = vpop.f32.mrb[0].mxu0
    %v211 = vadd.f32 %v72, %v210
    %v212 = vpop.f32.mrb[0].mxu0
    %v213 = vadd.f32 %v76, %v212
    %214 = vdwg.mxu0
    %215 = vmatprep.subr.bf16.mxu0 %v124
    %216 = vmatpush1.bf16.msra.mxu0 %v123
    %217 = vmatprep.subr.bf16.mxu0 0
    %218 = vmatpush1.bf16.msra.mxu0 0
    %219 = vmatprep.subr.bf16.mxu0 0
    %220 = vmatpush1.bf16.msra.mxu0 0
    %221 = vmatprep.subr.bf16.mxu0 0
    %222 = vmatpush1.bf16.msra.mxu0 0
    %223 = vmatprep.subr.bf16.mxu0 0
    %224 = vmatpush1.bf16.msra.mxu0 0
    %225 = vmatprep.subr.bf16.mxu0 0
    %226 = vmatpush1.bf16.msra.mxu0 0
    %227 = vmatprep.subr.bf16.mxu0 0
    %228 = vmatpush1.bf16.msra.mxu0 0
    %229 = vmatprep.subr.bf16.mxu0 0
    %230 = vmatpush1.bf16.msra.mxu0 0
    %231 = vmatprep.subr.bf16.mxu0 0
    %232 = vmatpush1.bf16.msra.mxu0 0
    %233 = vmatprep.subr.bf16.mxu0 0
    %234 = vmatpush1.bf16.msra.mxu0 0
    %235 = vmatprep.subr.bf16.mxu0 0
    %236 = vmatpush1.bf16.msra.mxu0 0
    %237 = vmatprep.subr.bf16.mxu0 0
    %238 = vmatpush1.bf16.msra.mxu0 0
    %239 = vmatprep.subr.bf16.mxu0 0
    %240 = vmatpush1.bf16.msra.mxu0 0
    %241 = vmatprep.subr.bf16.mxu0 0
    %242 = vmatpush1.bf16.msra.mxu0 0
    %243 = vmatprep.subr.bf16.mxu0 0
    %244 = vmatpush1.bf16.msra.mxu0 0
    %245 = vmatprep.subr.bf16.mxu0 0
    %246 = vmatpush1.bf16.msra.mxu0 0
    %247 = vmatprep.mubr.bf16.mxu0 0
    %248 = vmatmul.mubr.bf16.gmra.mrb[0].mxu0 %v131
    %v249 = vpop.f32.mrb[0].mxu0
    %v250 = vadd.f32 %v80, %v249
    %v251 = vpop.f32.mrb[0].mxu0
    %v252 = vadd.f32 %v84, %v251
    %v253 = vpop.f32.mrb[0].mxu0
    %v254 = vadd.f32 %v80, %v253
    %v255 = vpop.f32.mrb[0].mxu0
    %v256 = vadd.f32 %v84, %v255
    %257 = vmatprep.mubr.bf16.mxu0 0
    %258 = vmatmul.mubr.bf16.gmra.mrb[0].mxu0 %v134
    %v259 = vpop.f32.mrb[0].mxu0
    %v260 = vadd.f32 %v80, %v259
    %v261 = vpop.f32.mrb[0].mxu0
    %v262 = vadd.f32 %v84, %v261
    %v263 = vpop.f32.mrb[0].mxu0
    %v264 = vadd.f32 %v80, %v263
    %v265 = vpop.f32.mrb[0].mxu0
    %v266 = vadd.f32 %v84, %v265
    %267 = vmatprep.mubr.bf16.mxu0 0
    %268 = vmatmul.mubr.bf16.gmra.mrb[0].mxu0 %v137
    %v269 = vpop.f32.mrb[0].mxu0
    %v270 = vadd.f32 %v80, %v269
    %v271 = vpop.f32.mrb[0].mxu0
    %v272 = vadd.f32 %v84, %v271
    %v273 = vpop.f32.mrb[0].mxu0
    %v274 = vadd.f32 %v80, %v273
    %v275 = vpop.f32.mrb[0].mxu0
    %v276 = vadd.f32 %v84, %v275
    %277 = vmatprep.mubr.bf16.mxu0 0
    %278 = vmatmul.mubr.bf16.gmra.mrb[0].mxu0 %v140
    %v279 = vpop.f32.mrb[0].mxu0
    %v280 = vadd.f32 %v80, %v279
    %v281 = vpop.f32.mrb[0].mxu0
    %v282 = vadd.f32 %v84, %v281
    %v283 = vpop.f32.mrb[0].mxu0
    %v284 = vadd.f32 %v80, %v283
    %v285 = vpop.f32.mrb[0].mxu0
    %v286 = vadd.f32 %v84, %v285
    %287 = vdwg.mxu0
    %v288 = vmax.f32 %v177, 0.0
    %v289 = vmax.f32 %v179, 0.0
    %v290 = vmax.f32 %v250, 0.0
    %v291 = vmax.f32 %v252, 0.0
    %v292 = vmax.f32 %v181, 0.0
    %v293 = vmax.f32 %v183, 0.0
    %v294 = vmax.f32 %v254, 0.0
    %v295 = vmax.f32 %v256, 0.0
    %v296 = vmax.f32 %v187, 0.0
    %v297 = vmax.f32 %v189, 0.0
    %v298 = vmax.f32 %v260, 0.0
    %v299 = vmax.f32 %v262, 0.0
    %v300 = vmax.f32 %v191, 0.0
    %v301 = vmax.f32 %v193, 0.0
    %v302 = vmax.f32 %v264, 0.0
    %v303 = vmax.f32 %v266, 0.0
    %v304 = vmax.f32 %v197, 0.0
    %v305 = vmax.f32 %v199, 0.0
    %v306 = vmax.f32 %v270, 0.0
    %v307 = vmax.f32 %v272, 0.0
    %v308 = vmax.f32 %v201, 0.0
    %v309 = vmax.f32 %v203, 0.0
    %v310 = vmax.f32 %v274, 0.0
    %v311 = vmax.f32 %v276, 0.0
    %v312 = vmax.f32 %v207, 0.0
    %v313 = vmax.f32 %v209, 0.0
    %v314 = vmax.f32 %v280, 0.0
    %v315 = vmax.f32 %v282, 0.0
    %v316 = vmax.f32 %v211, 0.0
    %v317 = vmax.f32 %v213, 0.0
    %v318 = vmax.f32 %v284, 0.0
    %v319 = vmax.f32 %v286, 0.0
    %v320 = vpack.c.bf16 %v292, %v288
    %v321 = vpack.c.bf16 %v293, %v289
    %v322 = vpack.c.bf16 %v294, %v290
    %v323 = vpack.c.bf16 %v295, %v291
    %v324 = vpack.c.bf16 %v300, %v296
    %v325 = vpack.c.bf16 %v301, %v297
    %v326 = vpack.c.bf16 %v302, %v298
    %v327 = vpack.c.bf16 %v303, %v299
    %v328 = vpack.c.bf16 %v308, %v304
    %v329 = vpack.c.bf16 %v309, %v305
    %v330 = vpack.c.bf16 %v310, %v306
    %v331 = vpack.c.bf16 %v311, %v307
    %v332 = vpack.c.bf16 %v316, %v312
    %v333 = vpack.c.bf16 %v317, %v313
    %v334 = vpack.c.bf16 %v318, %v314
    %v335 = vpack.c.bf16 %v319, %v315
    %v336 = vld [vmem:[#allocation2] sm:$0xff]
    %v337 = vld [vmem:[#allocation2 + $0x8] sm:$0xf]
    %v338 = vld [vmem:[#allocation2 + $0xc] sm:$0xff]
    %v339 = vld [vmem:[#allocation2 + $0x14] sm:$0xf]
    %v340 = vld [vmem:[#allocation2 + $0x18] sm:$0xff]
    %v341 = vld [vmem:[#allocation2 + $0x20] sm:$0xf]
    %v342 = vld [vmem:[#allocation2 + $0x24] sm:$0xff]
    %v343 = vld [vmem:[#allocation2 + $0x2c] sm:$0xf]
    %v344 = vld [vmem:[#allocation2 + $0x30] sm:$0xff]
    %v345 = vld [vmem:[#allocation2 + $0x38] sm:$0xf]
    %v346 = vld [vmem:[#allocation2 + $0x3c] sm:$0xff]
    %v347 = vld [vmem:[#allocation2 + $0x44] sm:$0xf]
    %v348 = vld [vmem:[#allocation2 + $0x48] sm:$0xff]
    %v349 = vld [vmem:[#allocation2 + $0x50] sm:$0xf]
    %v350 = vld [vmem:[#allocation2 + $0x54] sm:$0xff]
    %v351 = vld [vmem:[#allocation2 + $0x5c] sm:$0xf]
    %v352 = vld [vmem:[#allocation2 + $0x60] sm:$0xff]
    %v353 = vld [vmem:[#allocation2 + $0x68] sm:$0xf]
    %v354 = vld [vmem:[#allocation2 + $0x6c] sm:$0xff]
    %v355 = vld [vmem:[#allocation2 + $0x74] sm:$0xf]
    %v356 = vld [vmem:[#allocation2 + $0x78] sm:$0xff]
    %v357 = vld [vmem:[#allocation2 + $0x80] sm:$0xf]
    %v358 = vld [vmem:[#allocation2 + $0x84] sm:$0xff]
    %v359 = vld [vmem:[#allocation2 + $0x8c] sm:$0xf]
    %v360 = vld [vmem:[#allocation2 + $0x90] sm:$0xff]
    %v361 = vld [vmem:[#allocation2 + $0x98] sm:$0xf]
    %v362 = vld [vmem:[#allocation2 + $0x9c] sm:$0xff]
    %v363 = vld [vmem:[#allocation2 + $0xa4] sm:$0xf]
    %v364 = vld [vmem:[#allocation2 + $0xa8] sm:$0xff]
    %v365 = vld [vmem:[#allocation2 + $0xb0] sm:$0xf]
    %v366 = vld [vmem:[#allocation2 + $0xb4] sm:$0xff]
    %v367 = vld [vmem:[#allocation2 + $0xbc] sm:$0xf]
    %v368 = vld [vmem:[#allocation2 + $0xc0] sm:$0xff]
    %v369 = vld [vmem:[#allocation2 + $0xc8] sm:$0xf]
    %v370 = vld [vmem:[#allocation2 + $0xcc] sm:$0xff]
    %v371 = vld [vmem:[#allocation2 + $0xd4] sm:$0xf]
    %v372 = vld [vmem:[#allocation2 + $0xd8] sm:$0xff]
    %v373 = vld [vmem:[#allocation2 + $0xe0] sm:$0xf]
    %v374 = vld [vmem:[#allocation2 + $0xe4] sm:$0xff]
    %v375 = vld [vmem:[#allocation2 + $0xec] sm:$0xf]
    %v376 = vld [vmem:[#allocation2 + $0xf0] sm:$0xff]
    %v377 = vld [vmem:[#allocation2 + $0xf8] sm:$0xf]
    %v378 = vld [vmem:[#allocation2 + $0xfc] sm:$0xff]
    %v379 = vld [vmem:[#allocation2 + $0x104] sm:$0xf]
    %v380 = vld [vmem:[#allocation2 + $0x108] sm:$0xff]
    %v381 = vld [vmem:[#allocation2 + $0x110] sm:$0xf]
    %v382 = vld [vmem:[#allocation2 + $0x114] sm:$0xff]
    %v383 = vld [vmem:[#allocation2 + $0x11c] sm:$0xf]
    %v384 = vld [vmem:[#allocation2 + $0x120] sm:$0xff]
    %v385 = vld [vmem:[#allocation2 + $0x128] sm:$0xf]
    %v386 = vld [vmem:[#allocation2 + $0x12c] sm:$0xff]
    %v387 = vld [vmem:[#allocation2 + $0x134] sm:$0xf]
    %v388 = vld [vmem:[#allocation2 + $0x138] sm:$0xff]
    %v389 = vld [vmem:[#allocation2 + $0x140] sm:$0xf]
    %v390 = vld [vmem:[#allocation2 + $0x144] sm:$0xff]
    %v391 = vld [vmem:[#allocation2 + $0x14c] sm:$0xf]
    %v392 = vld [vmem:[#allocation2 + $0x150] sm:$0xff]
    %v393 = vld [vmem:[#allocation2 + $0x158] sm:$0xf]
    %v394 = vld [vmem:[#allocation2 + $0x15c] sm:$0xff]
    %v395 = vld [vmem:[#allocation2 + $0x164] sm:$0xf]
    %v396 = vld [vmem:[#allocation2 + $0x168] sm:$0xff]
    %v397 = vld [vmem:[#allocation2 + $0x170] sm:$0xf]
    %v398 = vld [vmem:[#allocation2 + $0x174] sm:$0xff]
    %v399 = vld [vmem:[#allocation2 + $0x17c] sm:$0xf]
    %v400 = vld [vmem:[#allocation2 + $0x180] sm:$0xff]
    %v401 = vld [vmem:[#allocation2 + $0x188] sm:$0xf]
    %v402 = vld [vmem:[#allocation2 + $0x18c] sm:$0xff]
    %v403 = vld [vmem:[#allocation2 + $0x194] sm:$0xf]
    %v404 = vld [vmem:[#allocation2 + $0x198] sm:$0xff]
    %v405 = vld [vmem:[#allocation2 + $0x1a0] sm:$0xf]
    %v406 = vld [vmem:[#allocation2 + $0x1a4] sm:$0xff]
    %v407 = vld [vmem:[#allocation2 + $0x1ac] sm:$0xf]
    %v408 = vld [vmem:[#allocation2 + $0x1b0] sm:$0xff]
    %v409 = vld [vmem:[#allocation2 + $0x1b8] sm:$0xf]
    %v410 = vld [vmem:[#allocation2 + $0x1bc] sm:$0xff]
    %v411 = vld [vmem:[#allocation2 + $0x1c4] sm:$0xf]
    %v412 = vld [vmem:[#allocation2 + $0x1c8] sm:$0xff]
    %v413 = vld [vmem:[#allocation2 + $0x1d0] sm:$0xf]
    %v414 = vld [vmem:[#allocation2 + $0x1d4] sm:$0xff]
    %v415 = vld [vmem:[#allocation2 + $0x1dc] sm:$0xf]
    %v416 = vld [vmem:[#allocation2 + $0x1e0] sm:$0xff]
    %v417 = vld [vmem:[#allocation2 + $0x1e8] sm:$0xf]
    %v418 = vld [vmem:[#allocation2 + $0x1ec] sm:$0xff]
    %v419 = vld [vmem:[#allocation2 + $0x1f4] sm:$0xf]
    %v420 = vld [vmem:[#allocation2 + $0x1f8] sm:$0xff]
    %v421 = vld [vmem:[#allocation2 + $0x200] sm:$0xf]
    %v422 = vld [vmem:[#allocation2 + $0x204] sm:$0xff]
    %v423 = vld [vmem:[#allocation2 + $0x20c] sm:$0xf]
    %v424 = vld [vmem:[#allocation2 + $0x210] sm:$0xff]
    %v425 = vld [vmem:[#allocation2 + $0x218] sm:$0xf]
    %v426 = vld [vmem:[#allocation2 + $0x21c] sm:$0xff]
    %v427 = vld [vmem:[#allocation2 + $0x224] sm:$0xf]
    %v428 = vld [vmem:[#allocation2 + $0x228] sm:$0xff]
    %v429 = vld [vmem:[#allocation2 + $0x230] sm:$0xf]
    %v430 = vld [vmem:[#allocation2 + $0x234] sm:$0xff]
    %v431 = vld [vmem:[#allocation2 + $0x23c] sm:$0xf]
    %v432 = vld [vmem:[#allocation2 + $0x240] sm:$0xff]
    %v433 = vld [vmem:[#allocation2 + $0x248] sm:$0xf]
    %v434 = vld [vmem:[#allocation2 + $0x24c] sm:$0xff]
    %v435 = vld [vmem:[#allocation2 + $0x254] sm:$0xf]
    %v436 = vld [vmem:[#allocation2 + $0x258] sm:$0xff]
    %v437 = vld [vmem:[#allocation2 + $0x260] sm:$0xf]
    %v438 = vld [vmem:[#allocation2 + $0x264] sm:$0xff]
    %v439 = vld [vmem:[#allocation2 + $0x26c] sm:$0xf]
    %v440 = vld [vmem:[#allocation2 + $0x270] sm:$0xff]
    %v441 = vld [vmem:[#allocation2 + $0x278] sm:$0xf]
    %v442 = vld [vmem:[#allocation2 + $0x27c] sm:$0xff]
    %v443 = vld [vmem:[#allocation2 + $0x284] sm:$0xf]
    %v444 = vld [vmem:[#allocation2 + $0x288] sm:$0xff]
    %v445 = vld [vmem:[#allocation2 + $0x290] sm:$0xf]
    %v446 = vld [vmem:[#allocation2 + $0x294] sm:$0xff]
    %v447 = vld [vmem:[#allocation2 + $0x29c] sm:$0xf]
    %v448 = vld [vmem:[#allocation2 + $0x2a0] sm:$0xff]
    %v449 = vld [vmem:[#allocation2 + $0x2a8] sm:$0xf]
    %v450 = vld [vmem:[#allocation2 + $0x2ac] sm:$0xff]
    %v451 = vld [vmem:[#allocation2 + $0x2b4] sm:$0xf]
    %v452 = vld [vmem:[#allocation2 + $0x2b8] sm:$0xff]
    %v453 = vld [vmem:[#allocation2 + $0x2c0] sm:$0xf]
    %v454 = vld [vmem:[#allocation2 + $0x2c4] sm:$0xff]
    %v455 = vld [vmem:[#allocation2 + $0x2cc] sm:$0xf]
    %v456 = vld [vmem:[#allocation2 + $0x2d0] sm:$0xff]
    %v457 = vld [vmem:[#allocation2 + $0x2d8] sm:$0xf]
    %v458 = vld [vmem:[#allocation2 + $0x2dc] sm:$0xff]
    %v459 = vld [vmem:[#allocation2 + $0x2e4] sm:$0xf]
    %v460 = vld [vmem:[#allocation2 + $0x2e8] sm:$0xff]
    %v461 = vld [vmem:[#allocation2 + $0x2f0] sm:$0xf]
    %v462 = vld [vmem:[#allocation2 + $0x2f4] sm:$0xff]
    %v463 = vld [vmem:[#allocation2 + $0x2fc] sm:$0xf]
    %v464 = vld [vmem:[%s4] sm:$0x7]
    %v466 = vlaneseq
    %v467 = vshrl.u32 %v466, 7
    %v468 = vsub.s32 0, %v467
    %v469 = vrot.slane %v464, %v468
    %v470 = vlaneseq
    %v471 = vshrl.u32 %v470, 7
    %v472 = vsub.s32 1, %v471
    %v473 = vrot.slane %v464, %v472
    %v474 = vlaneseq
    %v475 = vshrl.u32 %v474, 7
    %v476 = vsub.s32 2, %v475
    %v477 = vrot.slane %v464, %v476
    %v609 = vunpack.c.l.b16 %v336
    %v610 = vunpack.c.h.b16 %v336
    %v611 = vunpack.c.l.b16 %v337
    %v612 = vunpack.c.l.b16 %v338
    %v613 = vunpack.c.h.b16 %v338
    %v614 = vunpack.c.l.b16 %v339
    %v615 = vunpack.c.l.b16 %v340
    %v616 = vunpack.c.h.b16 %v340
    %v617 = vunpack.c.l.b16 %v341
    %v618 = vunpack.c.l.b16 %v342
    %v619 = vunpack.c.h.b16 %v342
    %v620 = vunpack.c.l.b16 %v343
    %v621 = vunpack.c.l.b16 %v344
    %v622 = vunpack.c.h.b16 %v344
    %v623 = vunpack.c.l.b16 %v345
    %v624 = vunpack.c.l.b16 %v346
    %v625 = vunpack.c.h.b16 %v346
    %v626 = vunpack.c.l.b16 %v347
    %v627 = vunpack.c.l.b16 %v348
    %v628 = vunpack.c.h.b16 %v348
    %v629 = vunpack.c.l.b16 %v349
    %v630 = vunpack.c.l.b16 %v350
    %v631 = vunpack.c.h.b16 %v350
    %v632 = vunpack.c.l.b16 %v351
    %v633 = vunpack.c.l.b16 %v352
    %v634 = vunpack.c.h.b16 %v352
    %v635 = vunpack.c.l.b16 %v353
    %v636 = vunpack.c.l.b16 %v354
    %v637 = vunpack.c.h.b16 %v354
    %v638 = vunpack.c.l.b16 %v355
    %v639 = vunpack.c.l.b16 %v356
    %v640 = vunpack.c.h.b16 %v356
    %v641 = vunpack.c.l.b16 %v357
    %v642 = vunpack.c.l.b16 %v358
    %v643 = vunpack.c.h.b16 %v358
    %v644 = vunpack.c.l.b16 %v359
    %v645 = vunpack.c.l.b16 %v360
    %v646 = vunpack.c.h.b16 %v360
    %v647 = vunpack.c.l.b16 %v361
    %v648 = vunpack.c.l.b16 %v362
    %v649 = vunpack.c.h.b16 %v362
    %v650 = vunpack.c.l.b16 %v363
    %v651 = vunpack.c.l.b16 %v364
    %v652 = vunpack.c.h.b16 %v364
    %v653 = vunpack.c.l.b16 %v365
    %v654 = vunpack.c.l.b16 %v366
    %v655 = vunpack.c.h.b16 %v366
    %v656 = vunpack.c.l.b16 %v367
    %v657 = vunpack.c.l.b16 %v368
    %v658 = vunpack.c.h.b16 %v368
    %v659 = vunpack.c.l.b16 %v369
    %v660 = vunpack.c.l.b16 %v370
    %v661 = vunpack.c.h.b16 %v370
    %v662 = vunpack.c.l.b16 %v371
    %v663 = vunpack.c.l.b16 %v372
    %v664 = vunpack.c.h.b16 %v372
    %v665 = vunpack.c.l.b16 %v373
    %v666 = vunpack.c.l.b16 %v374
    %v667 = vunpack.c.h.b16 %v374
    %v668 = vunpack.c.l.b16 %v375
    %v669 = vunpack.c.l.b16 %v376
    %v670 = vunpack.c.h.b16 %v376
    %v671 = vunpack.c.l.b16 %v377
    %v672 = vunpack.c.l.b16 %v378
    %v673 = vunpack.c.h.b16 %v378
    %v674 = vunpack.c.l.b16 %v379
    %v675 = vunpack.c.l.b16 %v380
    %v676 = vunpack.c.h.b16 %v380
    %v677 = vunpack.c.l.b16 %v381
    %v678 = vunpack.c.l.b16 %v382
    %v679 = vunpack.c.h.b16 %v382
    %v680 = vunpack.c.l.b16 %v383
    %v681 = vunpack.c.l.b16 %v384
    %v682 = vunpack.c.h.b16 %v384
    %v683 = vunpack.c.l.b16 %v385
    %v684 = vunpack.c.l.b16 %v386
    %v685 = vunpack.c.h.b16 %v386
    %v686 = vunpack.c.l.b16 %v387
    %v687 = vunpack.c.l.b16 %v388
    %v688 = vunpack.c.h.b16 %v388
    %v689 = vunpack.c.l.b16 %v389
    %v690 = vunpack.c.l.b16 %v390
    %v691 = vunpack.c.h.b16 %v390
    %v692 = vunpack.c.l.b16 %v391
    %v693 = vunpack.c.l.b16 %v392
    %v694 = vunpack.c.h.b16 %v392
    %v695 = vunpack.c.l.b16 %v393
    %v696 = vunpack.c.l.b16 %v394
    %v697 = vunpack.c.h.b16 %v394
    %v698 = vunpack.c.l.b16 %v395
    %v699 = vunpack.c.l.b16 %v396
    %v700 = vunpack.c.h.b16 %v396
    %v701 = vunpack.c.l.b16 %v397
    %v702 = vunpack.c.l.b16 %v398
    %v703 = vunpack.c.h.b16 %v398
    %v704 = vunpack.c.l.b16 %v399
    %v705 = vunpack.c.l.b16 %v400
    %v706 = vunpack.c.h.b16 %v400
    %v707 = vunpack.c.l.b16 %v401
    %v708 = vunpack.c.l.b16 %v402
    %v709 = vunpack.c.h.b16 %v402
    %v710 = vunpack.c.l.b16 %v403
    %v711 = vunpack.c.l.b16 %v404
    %v712 = vunpack.c.h.b16 %v404
    %v713 = vunpack.c.l.b16 %v405
    %v714 = vunpack.c.l.b16 %v406
    %v715 = vunpack.c.h.b16 %v406
    %v716 = vunpack.c.l.b16 %v407
    %v717 = vunpack.c.l.b16 %v408
    %v718 = vunpack.c.h.b16 %v408
    %v719 = vunpack.c.l.b16 %v409
    %v720 = vunpack.c.l.b16 %v410
    %v721 = vunpack.c.h.b16 %v410
    %v722 = vunpack.c.l.b16 %v411
    %v723 = vunpack.c.l.b16 %v412
    %v724 = vunpack.c.h.b16 %v412
    %v725 = vunpack.c.l.b16 %v413
    %v726 = vunpack.c.l.b16 %v414
    %v727 = vunpack.c.h.b16 %v414
    %v728 = vunpack.c.l.b16 %v415
    %v729 = vunpack.c.l.b16 %v416
    %v730 = vunpack.c.h.b16 %v416
    %v731 = vunpack.c.l.b16 %v417
    %v732 = vunpack.c.l.b16 %v418
    %v733 = vunpack.c.h.b16 %v418
    %v734 = vunpack.c.l.b16 %v419
    %v735 = vunpack.c.l.b16 %v420
    %v736 = vunpack.c.h.b16 %v420
    %v737 = vunpack.c.l.b16 %v421
    %v738 = vunpack.c.l.b16 %v422
    %v739 = vunpack.c.h.b16 %v422
    %v740 = vunpack.c.l.b16 %v423
    %v741 = vunpack.c.l.b16 %v424
    %v742 = vunpack.c.h.b16 %v424
    %v743 = vunpack.c.l.b16 %v425
    %v744 = vunpack.c.l.b16 %v426
    %v745 = vunpack.c.h.b16 %v426
    %v746 = vunpack.c.l.b16 %v427
    %v747 = vunpack.c.l.b16 %v428
    %v748 = vunpack.c.h.b16 %v428
    %v749 = vunpack.c.l.b16 %v429
    %v750 = vunpack.c.l.b16 %v430
    %v751 = vunpack.c.h.b16 %v430
    %v752 = vunpack.c.l.b16 %v431
    %v753 = vunpack.c.l.b16 %v432
    %v754 = vunpack.c.h.b16 %v432
    %v755 = vunpack.c.l.b16 %v433
    %v756 = vunpack.c.l.b16 %v434
    %v757 = vunpack.c.h.b16 %v434
    %v758 = vunpack.c.l.b16 %v435
    %v759 = vunpack.c.l.b16 %v436
    %v760 = vunpack.c.h.b16 %v436
    %v761 = vunpack.c.l.b16 %v437
    %v762 = vunpack.c.l.b16 %v438
    %v763 = vunpack.c.h.b16 %v438
    %v764 = vunpack.c.l.b16 %v439
    %v765 = vunpack.c.l.b16 %v440
    %v766 = vunpack.c.h.b16 %v440
    %v767 = vunpack.c.l.b16 %v441
    %v768 = vunpack.c.l.b16 %v442
    %v769 = vunpack.c.h.b16 %v442
    %v770 = vunpack.c.l.b16 %v443
    %v771 = vunpack.c.l.b16 %v444
    %v772 = vunpack.c.h.b16 %v444
    %v773 = vunpack.c.l.b16 %v445
    %v774 = vunpack.c.l.b16 %v446
    %v775 = vunpack.c.h.b16 %v446
    %v776 = vunpack.c.l.b16 %v447
    %v777 = vunpack.c.l.b16 %v448
    %v778 = vunpack.c.h.b16 %v448
    %v779 = vunpack.c.l.b16 %v449
    %v780 = vunpack.c.l.b16 %v450
    %v781 = vunpack.c.h.b16 %v450
    %v782 = vunpack.c.l.b16 %v451
    %v783 = vunpack.c.l.b16 %v452
    %v784 = vunpack.c.h.b16 %v452
    %v785 = vunpack.c.l.b16 %v453
    %v786 = vunpack.c.l.b16 %v454
    %v787 = vunpack.c.h.b16 %v454
    %v788 = vunpack.c.l.b16 %v455
    %v789 = vunpack.c.l.b16 %v456
    %v790 = vunpack.c.h.b16 %v456
    %v791 = vunpack.c.l.b16 %v457
    %v792 = vunpack.c.l.b16 %v458
    %v793 = vunpack.c.h.b16 %v458
    %v794 = vunpack.c.l.b16 %v459
    %v795 = vunpack.c.l.b16 %v460
    %v796 = vunpack.c.h.b16 %v460
    %v797 = vunpack.c.l.b16 %v461
    %v798 = vunpack.c.l.b16 %v462
    %v799 = vunpack.c.h.b16 %v462
    %v800 = vunpack.c.l.b16 %v463
    %v801 = vpack.c.b16 %v612, %v609
    %v802 = vpack.c.b16 %v613, %v610
    %v803 = vpack.c.b16 %v614, %v611
    %v804 = vpack.c.b16 %v618, %v615
    %v805 = vpack.c.b16 %v619, %v616
    %v806 = vpack.c.b16 %v620, %v617
    %v807 = vpack.c.b16 %v624, %v621
    %v808 = vpack.c.b16 %v625, %v622
    %v809 = vpack.c.b16 %v626, %v623
    %v810 = vpack.c.b16 %v630, %v627
    %v811 = vpack.c.b16 %v631, %v628
    %v812 = vpack.c.b16 %v632, %v629
    %v813 = vpack.c.b16 %v636, %v633
    %v814 = vpack.c.b16 %v637, %v634
    %v815 = vpack.c.b16 %v638, %v635
    %v816 = vpack.c.b16 %v642, %v639
    %v817 = vpack.c.b16 %v643, %v640
    %v818 = vpack.c.b16 %v644, %v641
    %v819 = vpack.c.b16 %v648, %v645
    %v820 = vpack.c.b16 %v649, %v646
    %v821 = vpack.c.b16 %v650, %v647
    %v822 = vpack.c.b16 %v654, %v651
    %v823 = vpack.c.b16 %v655, %v652
    %v824 = vpack.c.b16 %v656, %v653
    %v825 = vpack.c.b16 %v660, %v657
    %v826 = vpack.c.b16 %v661, %v658
    %v827 = vpack.c.b16 %v662, %v659
    %v828 = vpack.c.b16 %v666, %v663
    %v829 = vpack.c.b16 %v667, %v664
    %v830 = vpack.c.b16 %v668, %v665
    %v831 = vpack.c.b16 %v672, %v669
    %v832 = vpack.c.b16 %v673, %v670
    %v833 = vpack.c.b16 %v674, %v671
    %v834 = vpack.c.b16 %v678, %v675
    %v835 = vpack.c.b16 %v679, %v676
    %v836 = vpack.c.b16 %v680, %v677
    %v837 = vpack.c.b16 %v684, %v681
    %v838 = vpack.c.b16 %v685, %v682
    %v839 = vpack.c.b16 %v686, %v683
    %v840 = vpack.c.b16 %v690, %v687
    %v841 = vpack.c.b16 %v691, %v688
    %v842 = vpack.c.b16 %v692, %v689
    %v843 = vpack.c.b16 %v696, %v693
    %v844 = vpack.c.b16 %v697, %v694
    %v845 = vpack.c.b16 %v698, %v695
    %v846 = vpack.c.b16 %v702, %v699
    %v847 = vpack.c.b16 %v703, %v700
    %v848 = vpack.c.b16 %v704, %v701
    %v849 = vpack.c.b16 %v708, %v705
    %v850 = vpack.c.b16 %v709, %v706
    %v851 = vpack.c.b16 %v710, %v707
    %v852 = vpack.c.b16 %v714, %v711
    %v853 = vpack.c.b16 %v715, %v712
    %v854 = vpack.c.b16 %v716, %v713
    %v855 = vpack.c.b16 %v720, %v717
    %v856 = vpack.c.b16 %v721, %v718
    %v857 = vpack.c.b16 %v722, %v719
    %v858 = vpack.c.b16 %v726, %v723
    %v859 = vpack.c.b16 %v727, %v724
    %v860 = vpack.c.b16 %v728, %v725
    %v861 = vpack.c.b16 %v732, %v729
    %v862 = vpack.c.b16 %v733, %v730
    %v863 = vpack.c.b16 %v734, %v731
    %v864 = vpack.c.b16 %v738, %v735
    %v865 = vpack.c.b16 %v739, %v736
    %v866 = vpack.c.b16 %v740, %v737
    %v867 = vpack.c.b16 %v744, %v741
    %v868 = vpack.c.b16 %v745, %v742
    %v869 = vpack.c.b16 %v746, %v743
    %v870 = vpack.c.b16 %v750, %v747
    %v871 = vpack.c.b16 %v751, %v748
    %v872 = vpack.c.b16 %v752, %v749
    %v873 = vpack.c.b16 %v756, %v753
    %v874 = vpack.c.b16 %v757, %v754
    %v875 = vpack.c.b16 %v758, %v755
    %v876 = vpack.c.b16 %v762, %v759
    %v877 = vpack.c.b16 %v763, %v760
    %v878 = vpack.c.b16 %v764, %v761
    %v879 = vpack.c.b16 %v768, %v765
    %v880 = vpack.c.b16 %v769, %v766
    %v881 = vpack.c.b16 %v770, %v767
    %v882 = vpack.c.b16 %v774, %v771
    %v883 = vpack.c.b16 %v775, %v772
    %v884 = vpack.c.b16 %v776, %v773
    %v885 = vpack.c.b16 %v780, %v777
    %v886 = vpack.c.b16 %v781, %v778
    %v887 = vpack.c.b16 %v782, %v779
    %v888 = vpack.c.b16 %v786, %v783
    %v889 = vpack.c.b16 %v787, %v784
    %v890 = vpack.c.b16 %v788, %v785
    %v891 = vpack.c.b16 %v792, %v789
    %v892 = vpack.c.b16 %v793, %v790
    %v893 = vpack.c.b16 %v794, %v791
    %v894 = vpack.c.b16 %v798, %v795
    %v895 = vpack.c.b16 %v799, %v796
    %v896 = vpack.c.b16 %v800, %v797
    %993 = vmatprep.subr.bf16.mxu0 %v802
    %994 = vmatpush1.bf16.msra.mxu0 %v801
    %995 = vmatprep.subr.bf16.mxu0 %v805
    %996 = vmatpush1.bf16.msra.mxu0 %v804
    %997 = vmatprep.subr.bf16.mxu0 %v808
    %998 = vmatpush1.bf16.msra.mxu0 %v807
    %999 = vmatprep.subr.bf16.mxu0 %v811
    %1000 = vmatpush1.bf16.msra.mxu0 %v810
    %1001 = vmatprep.subr.bf16.mxu0 %v814
    %1002 = vmatpush1.bf16.msra.mxu0 %v813
    %1003 = vmatprep.subr.bf16.mxu0 %v817
    %1004 = vmatpush1.bf16.msra.mxu0 %v816
    %1005 = vmatprep.subr.bf16.mxu0 %v820
    %1006 = vmatpush1.bf16.msra.mxu0 %v819
    %1007 = vmatprep.subr.bf16.mxu0 %v823
    %1008 = vmatpush1.bf16.msra.mxu0 %v822
    %1009 = vmatprep.subr.bf16.mxu0 %v826
    %1010 = vmatpush1.bf16.msra.mxu0 %v825
    %1011 = vmatprep.subr.bf16.mxu0 %v829
    %1012 = vmatpush1.bf16.msra.mxu0 %v828
    %1013 = vmatprep.subr.bf16.mxu0 %v832
    %1014 = vmatpush1.bf16.msra.mxu0 %v831
    %1015 = vmatprep.subr.bf16.mxu0 %v835
    %1016 = vmatpush1.bf16.msra.mxu0 %v834
    %1017 = vmatprep.subr.bf16.mxu0 %v838
    %1018 = vmatpush1.bf16.msra.mxu0 %v837
    %1019 = vmatprep.subr.bf16.mxu0 %v841
    %1020 = vmatpush1.bf16.msra.mxu0 %v840
    %1021 = vmatprep.subr.bf16.mxu0 %v844
    %1022 = vmatpush1.bf16.msra.mxu0 %v843
    %1023 = vmatprep.subr.bf16.mxu0 %v847
    %1024 = vmatpush1.bf16.msra.mxu0 %v846
    %1025 = vmatprep.mubr.bf16.mxu0 %v321
    %1026 = vmatmul.mubr.bf16.gmra.mrb[0].mxu0 %v320
    %v1027 = vpop.f32.mrb[0].mxu0
    %v1028 = vadd.f32 %v469, %v1027
    %v1029 = vpop.f32.mrb[0].mxu0
    %v1030 = vadd.f32 %v473, %v1029
    %v1031 = vpop.f32.mrb[0].mxu0
    %v1032 = vadd.f32 %v469, %v1031
    %v1033 = vpop.f32.mrb[0].mxu0
    %v1034 = vadd.f32 %v473, %v1033
    %1035 = vmatprep.mubr.bf16.mxu0 %v325
    %1036 = vmatmul.mubr.bf16.gmra.mrb[0].mxu0 %v324
    %v1037 = vpop.f32.mrb[0].mxu0
    %v1038 = vadd.f32 %v469, %v1037
    %v1039 = vpop.f32.mrb[0].mxu0
    %v1040 = vadd.f32 %v473, %v1039
    %v1041 = vpop.f32.mrb[0].mxu0
    %v1042 = vadd.f32 %v469, %v1041
    %v1043 = vpop.f32.mrb[0].mxu0
    %v1044 = vadd.f32 %v473, %v1043
    %1045 = vmatprep.mubr.bf16.mxu0 %v329
    %1046 = vmatmul.mubr.bf16.gmra.mrb[0].mxu0 %v328
    %v1047 = vpop.f32.mrb[0].mxu0
    %v1048 = vadd.f32 %v469, %v1047
    %v1049 = vpop.f32.mrb[0].mxu0
    %v1050 = vadd.f32 %v473, %v1049
    %v1051 = vpop.f32.mrb[0].mxu0
    %v1052 = vadd.f32 %v469, %v1051
    %v1053 = vpop.f32.mrb[0].mxu0
    %v1054 = vadd.f32 %v473, %v1053
    %1055 = vmatprep.mubr.bf16.mxu0 %v333
    %1056 = vmatmul.mubr.bf16.gmra.mrb[0].mxu0 %v332
    %v1057 = vpop.f32.mrb[0].mxu0
    %v1058 = vadd.f32 %v469, %v1057
    %v1059 = vpop.f32.mrb[0].mxu0
    %v1060 = vadd.f32 %v473, %v1059
    %v1061 = vpop.f32.mrb[0].mxu0
    %v1062 = vadd.f32 %v469, %v1061
    %v1063 = vpop.f32.mrb[0].mxu0
    %v1064 = vadd.f32 %v473, %v1063
    %1065 = vdwg.mxu0
    %1066 = vmatprep.subr.bf16.mxu0 %v850
    %1067 = vmatpush1.bf16.msra.mxu0 %v849
    %1068 = vmatprep.subr.bf16.mxu0 %v853
    %1069 = vmatpush1.bf16.msra.mxu0 %v852
    %1070 = vmatprep.subr.bf16.mxu0 %v856
    %1071 = vmatpush1.bf16.msra.mxu0 %v855
    %1072 = vmatprep.subr.bf16.mxu0 %v859
    %1073 = vmatpush1.bf16.msra.mxu0 %v858
    %1074 = vmatprep.subr.bf16.mxu0 %v862
    %1075 = vmatpush1.bf16.msra.mxu0 %v861
    %1076 = vmatprep.subr.bf16.mxu0 %v865
    %1077 = vmatpush1.bf16.msra.mxu0 %v864
    %1078 = vmatprep.subr.bf16.mxu0 %v868
    %1079 = vmatpush1.bf16.msra.mxu0 %v867
    %1080 = vmatprep.subr.bf16.mxu0 %v871
    %1081 = vmatpush1.bf16.msra.mxu0 %v870
    %1082 = vmatprep.subr.bf16.mxu0 %v874
    %1083 = vmatpush1.bf16.msra.mxu0 %v873
    %1084 = vmatprep.subr.bf16.mxu0 %v877
    %1085 = vmatpush1.bf16.msra.mxu0 %v876
    %1086 = vmatprep.subr.bf16.mxu0 %v880
    %1087 = vmatpush1.bf16.msra.mxu0 %v879
    %1088 = vmatprep.subr.bf16.mxu0 %v883
    %1089 = vmatpush1.bf16.msra.mxu0 %v882
    %1090 = vmatprep.subr.bf16.mxu0 %v886
    %1091 = vmatpush1.bf16.msra.mxu0 %v885
    %1092 = vmatprep.subr.bf16.mxu0 %v889
    %1093 = vmatpush1.bf16.msra.mxu0 %v888
    %1094 = vmatprep.subr.bf16.mxu0 %v892
    %1095 = vmatpush1.bf16.msra.mxu0 %v891
    %1096 = vmatprep.subr.bf16.mxu0 %v895
    %1097 = vmatpush1.bf16.msra.mxu0 %v894
    %1098 = vmatprep.mubr.bf16.mxu0 %v323
    %1099 = vmatmul.mubr.bf16.gmra.mrb[0].mxu0 %v322
    %v1100 = vpop.f32.mrb[0].mxu0
    %v1101 = vadd.f32 %v1028, %v1100
    %v1102 = vpop.f32.mrb[0].mxu0
    %v1103 = vadd.f32 %v1030, %v1102
    %v1104 = vpop.f32.mrb[0].mxu0
    %v1105 = vadd.f32 %v1032, %v1104
    %v1106 = vpop.f32.mrb[0].mxu0
    %v1107 = vadd.f32 %v1034, %v1106
    %1108 = vmatprep.mubr.bf16.mxu0 %v327
    %1109 = vmatmul.mubr.bf16.gmra.mrb[0].mxu0 %v326
    %v1110 = vpop.f32.mrb[0].mxu0
    %v1111 = vadd.f32 %v1038, %v1110
    %v1112 = vpop.f32.mrb[0].mxu0
    %v1113 = vadd.f32 %v1040, %v1112
    %v1114 = vpop.f32.mrb[0].mxu0
    %v1115 = vadd.f32 %v1042, %v1114
    %v1116 = vpop.f32.mrb[0].mxu0
    %v1117 = vadd.f32 %v1044, %v1116
    %1118 = vmatprep.mubr.bf16.mxu0 %v331
    %1119 = vmatmul.mubr.bf16.gmra.mrb[0].mxu0 %v330
    %v1120 = vpop.f32.mrb[0].mxu0
    %v1121 = vadd.f32 %v1048, %v1120
    %v1122 = vpop.f32.mrb[0].mxu0
    %v1123 = vadd.f32 %v1050, %v1122
    %v1124 = vpop.f32.mrb[0].mxu0
    %v1125 = vadd.f32 %v1052, %v1124
    %v1126 = vpop.f32.mrb[0].mxu0
    %v1127 = vadd.f32 %v1054, %v1126
    %1128 = vmatprep.mubr.bf16.mxu0 %v335
    %1129 = vmatmul.mubr.bf16.gmra.mrb[0].mxu0 %v334
    %v1130 = vpop.f32.mrb[0].mxu0
    %v1131 = vadd.f32 %v1058, %v1130
    %v1132 = vpop.f32.mrb[0].mxu0
    %v1133 = vadd.f32 %v1060, %v1132
    %v1134 = vpop.f32.mrb[0].mxu0
    %v1135 = vadd.f32 %v1062, %v1134
    %v1136 = vpop.f32.mrb[0].mxu0
    %v1137 = vadd.f32 %v1064, %v1136
    %1138 = vdwg.mxu0
    %1139 = vmatprep.subr.bf16.mxu0 0
    %1140 = vmatpush1.bf16.msra.mxu0 %v803
    %1141 = vmatprep.subr.bf16.mxu0 0
    %1142 = vmatpush1.bf16.msra.mxu0 %v806
    %1143 = vmatprep.subr.bf16.mxu0 0
    %1144 = vmatpush1.bf16.msra.mxu0 %v809
    %1145 = vmatprep.subr.bf16.mxu0 0
    %1146 = vmatpush1.bf16.msra.mxu0 %v812
    %1147 = vmatprep.subr.bf16.mxu0 0
    %1148 = vmatpush1.bf16.msra.mxu0 %v815
    %1149 = vmatprep.subr.bf16.mxu0 0
    %1150 = vmatpush1.bf16.msra.mxu0 %v818
    %1151 = vmatprep.subr.bf16.mxu0 0
    %1152 = vmatpush1.bf16.msra.mxu0 %v821
    %1153 = vmatprep.subr.bf16.mxu0 0
    %1154 = vmatpush1.bf16.msra.mxu0 %v824
    %1155 = vmatprep.subr.bf16.mxu0 0
    %1156 = vmatpush1.bf16.msra.mxu0 %v827
    %1157 = vmatprep.subr.bf16.mxu0 0
    %1158 = vmatpush1.bf16.msra.mxu0 %v830
    %1159 = vmatprep.subr.bf16.mxu0 0
    %1160 = vmatpush1.bf16.msra.mxu0 %v833
    %1161 = vmatprep.subr.bf16.mxu0 0
    %1162 = vmatpush1.bf16.msra.mxu0 %v836
    %1163 = vmatprep.subr.bf16.mxu0 0
    %1164 = vmatpush1.bf16.msra.mxu0 %v839
    %1165 = vmatprep.subr.bf16.mxu0 0
    %1166 = vmatpush1.bf16.msra.mxu0 %v842
    %1167 = vmatprep.subr.bf16.mxu0 0
    %1168 = vmatpush1.bf16.msra.mxu0 %v845
    %1169 = vmatprep.subr.bf16.mxu0 0
    %1170 = vmatpush1.bf16.msra.mxu0 %v848
    %1171 = vmatprep.mubr.bf16.mxu0 %v321
    %1172 = vmatmul.mubr.bf16.gmra.mrb[0].mxu0 %v320
    %v1173 = vpop.f32.mrb[0].mxu0
    %v1174 = vadd.f32 %v477, %v1173
    %v1175 = vpop.f32.mrb[0].mxu0
    %v1176 = vpop.f32.mrb[0].mxu0
    %v1177 = vadd.f32 %v477, %v1176
    %v1178 = vpop.f32.mrb[0].mxu0
    %1179 = vmatprep.mubr.bf16.mxu0 %v325
    %1180 = vmatmul.mubr.bf16.gmra.mrb[0].mxu0 %v324
    %v1181 = vpop.f32.mrb[0].mxu0
    %v1182 = vadd.f32 %v477, %v1181
    %v1183 = vpop.f32.mrb[0].mxu0
    %v1184 = vpop.f32.mrb[0].mxu0
    %v1185 = vadd.f32 %v477, %v1184
    %v1186 = vpop.f32.mrb[0].mxu0
    %1187 = vmatprep.mubr.bf16.mxu0 %v329
    %1188 = vmatmul.mubr.bf16.gmra.mrb[0].mxu0 %v328
    %v1189 = vpop.f32.mrb[0].mxu0
    %v1190 = vadd.f32 %v477, %v1189
    %v1191 = vpop.f32.mrb[0].mxu0
    %v1192 = vpop.f32.mrb[0].mxu0
    %v1193 = vadd.f32 %v477, %v1192
    %v1194 = vpop.f32.mrb[0].mxu0
    %1195 = vmatprep.mubr.bf16.mxu0 %v333
    %1196 = vmatmul.mubr.bf16.gmra.mrb[0].mxu0 %v332
    %v1197 = vpop.f32.mrb[0].mxu0
    %v1198 = vadd.f32 %v477, %v1197
    %v1199 = vpop.f32.mrb[0].mxu0
    %v1200 = vpop.f32.mrb[0].mxu0
    %v1201 = vadd.f32 %v477, %v1200
    %v1202 = vpop.f32.mrb[0].mxu0
    %1203 = vdwg.mxu0
    %1204 = vmatprep.subr.bf16.mxu0 0
    %1205 = vmatpush1.bf16.msra.mxu0 %v851
    %1206 = vmatprep.subr.bf16.mxu0 0
    %1207 = vmatpush1.bf16.msra.mxu0 %v854
    %1208 = vmatprep.subr.bf16.mxu0 0
    %1209 = vmatpush1.bf16.msra.mxu0 %v857
    %1210 = vmatprep.subr.bf16.mxu0 0
    %1211 = vmatpush1.bf16.msra.mxu0 %v860
    %1212 = vmatprep.subr.bf16.mxu0 0
    %1213 = vmatpush1.bf16.msra.mxu0 %v863
    %1214 = vmatprep.subr.bf16.mxu0 0
    %1215 = vmatpush1.bf16.msra.mxu0 %v866
    %1216 = vmatprep.subr.bf16.mxu0 0
    %1217 = vmatpush1.bf16.msra.mxu0 %v869
    %1218 = vmatprep.subr.bf16.mxu0 0
    %1219 = vmatpush1.bf16.msra.mxu0 %v872
    %1220 = vmatprep.subr.bf16.mxu0 0
    %1221 = vmatpush1.bf16.msra.mxu0 %v875
    %1222 = vmatprep.subr.bf16.mxu0 0
    %1223 = vmatpush1.bf16.msra.mxu0 %v878
    %1224 = vmatprep.subr.bf16.mxu0 0
    %1225 = vmatpush1.bf16.msra.mxu0 %v881
    %1226 = vmatprep.subr.bf16.mxu0 0
    %1227 = vmatpush1.bf16.msra.mxu0 %v884
    %1228 = vmatprep.subr.bf16.mxu0 0
    %1229 = vmatpush1.bf16.msra.mxu0 %v887
    %1230 = vmatprep.subr.bf16.mxu0 0
    %1231 = vmatpush1.bf16.msra.mxu0 %v890
    %1232 = vmatprep.subr.bf16.mxu0 0
    %1233 = vmatpush1.bf16.msra.mxu0 %v893
    %1234 = vmatprep.subr.bf16.mxu0 0
    %1235 = vmatpush1.bf16.msra.mxu0 %v896
    %1236 = vmatprep.mubr.bf16.mxu0 %v323
    %1237 = vmatmul.mubr.bf16.gmra.mrb[0].mxu0 %v322
    %v1238 = vpop.f32.mrb[0].mxu0
    %v1239 = vadd.f32 %v1174, %v1238
    %v1240 = vpop.f32.mrb[0].mxu0
    %v1241 = vpop.f32.mrb[0].mxu0
    %v1242 = vadd.f32 %v1177, %v1241
    %v1243 = vpop.f32.mrb[0].mxu0
    %1244 = vmatprep.mubr.bf16.mxu0 %v327
    %1245 = vmatmul.mubr.bf16.gmra.mrb[0].mxu0 %v326
    %v1246 = vpop.f32.mrb[0].mxu0
    %v1247 = vadd.f32 %v1182, %v1246
    %v1248 = vpop.f32.mrb[0].mxu0
    %v1249 = vpop.f32.mrb[0].mxu0
    %v1250 = vadd.f32 %v1185, %v1249
    %v1251 = vpop.f32.mrb[0].mxu0
    %1252 = vmatprep.mubr.bf16.mxu0 %v331
    %1253 = vmatmul.mubr.bf16.gmra.mrb[0].mxu0 %v330
    %v1254 = vpop.f32.mrb[0].mxu0
    %v1255 = vadd.f32 %v1190, %v1254
    %v1256 = vpop.f32.mrb[0].mxu0
    %v1257 = vpop.f32.mrb[0].mxu0
    %v1258 = vadd.f32 %v1193, %v1257
    %v1259 = vpop.f32.mrb[0].mxu0
    %1260 = vmatprep.mubr.bf16.mxu0 %v335
    %1261 = vmatmul.mubr.bf16.gmra.mrb[0].mxu0 %v334
    %v1262 = vpop.f32.mrb[0].mxu0
    %v1263 = vadd.f32 %v1198, %v1262
    %v1264 = vpop.f32.mrb[0].mxu0
    %v1265 = vpop.f32.mrb[0].mxu0
    %v1266 = vadd.f32 %v1201, %v1265
    %v1267 = vpop.f32.mrb[0].mxu0
    %1268 = vdwg.mxu0
    %v1269 = vmax.f32 %v1101, 0.0
    %v1270 = vmax.f32 %v1103, 0.0
    %v1271 = vmax.f32 %v1239, 0.0
    %v1272 = vmax.f32 %v1105, 0.0
    %v1273 = vmax.f32 %v1107, 0.0
    %v1274 = vmax.f32 %v1242, 0.0
    %v1275 = vmax.f32 %v1111, 0.0
    %v1276 = vmax.f32 %v1113, 0.0
    %v1277 = vmax.f32 %v1247, 0.0
    %v1278 = vmax.f32 %v1115, 0.0
    %v1279 = vmax.f32 %v1117, 0.0
    %v1280 = vmax.f32 %v1250, 0.0
    %v1281 = vmax.f32 %v1121, 0.0
    %v1282 = vmax.f32 %v1123, 0.0
    %v1283 = vmax.f32 %v1255, 0.0
    %v1284 = vmax.f32 %v1125, 0.0
    %v1285 = vmax.f32 %v1127, 0.0
    %v1286 = vmax.f32 %v1258, 0.0
    %v1287 = vmax.f32 %v1131, 0.0
    %v1288 = vmax.f32 %v1133, 0.0
    %v1289 = vmax.f32 %v1263, 0.0
    %v1290 = vmax.f32 %v1135, 0.0
    %v1291 = vmax.f32 %v1137, 0.0
    %v1292 = vmax.f32 %v1266, 0.0
    %v1293 = vpack.c.bf16 %v1272, %v1269
    %v1294 = vpack.c.bf16 %v1273, %v1270
    %v1295 = vpack.c.bf16 %v1274, %v1271
    %v1296 = vpack.c.bf16 %v1278, %v1275
    %v1297 = vpack.c.bf16 %v1279, %v1276
    %v1298 = vpack.c.bf16 %v1280, %v1277
    %v1299 = vpack.c.bf16 %v1284, %v1281
    %v1300 = vpack.c.bf16 %v1285, %v1282
    %v1301 = vpack.c.bf16 %v1286, %v1283
    %v1302 = vpack.c.bf16 %v1290, %v1287
    %v1303 = vpack.c.bf16 %v1291, %v1288
    %v1304 = vpack.c.bf16 %v1292, %v1289
    %v1305 = vld [vmem:[#allocation4] sm:$0xf]
    %v1306 = vld [vmem:[#allocation4 + $0x4] sm:$0xf]
    %v1307 = vld [vmem:[#allocation4 + $0x8] sm:$0xf]
    %v1308 = vld [vmem:[#allocation4 + $0xc] sm:$0xf]
    %v1309 = vld [vmem:[#allocation4 + $0x10] sm:$0xf]
    %v1310 = vld [vmem:[#allocation4 + $0x14] sm:$0xf]
    %v1311 = vld [vmem:[#allocation4 + $0x18] sm:$0xf]
    %v1312 = vld [vmem:[#allocation4 + $0x1c] sm:$0xf]
    %v1313 = vld [vmem:[#allocation4 + $0x20] sm:$0xf]
    %v1314 = vld [vmem:[#allocation4 + $0x24] sm:$0xf]
    %v1315 = vld [vmem:[#allocation4 + $0x28] sm:$0xf]
    %v1316 = vld [vmem:[#allocation4 + $0x2c] sm:$0xf]
    %v1317 = vld [vmem:[#allocation4 + $0x30] sm:$0xf]
    %v1318 = vld [vmem:[#allocation4 + $0x34] sm:$0xf]
    %v1319 = vld [vmem:[#allocation4 + $0x38] sm:$0xf]
    %v1320 = vld [vmem:[#allocation4 + $0x3c] sm:$0xf]
    %v1321 = vld [vmem:[#allocation4 + $0x40] sm:$0xf]
    %v1322 = vld [vmem:[#allocation4 + $0x44] sm:$0xf]
    %v1323 = vld [vmem:[#allocation4 + $0x48] sm:$0xf]
    %v1324 = vld [vmem:[#allocation4 + $0x4c] sm:$0xf]
    %v1325 = vld [vmem:[#allocation4 + $0x50] sm:$0xf]
    %v1326 = vld [vmem:[#allocation4 + $0x54] sm:$0xf]
    %v1327 = vld [vmem:[#allocation4 + $0x58] sm:$0xf]
    %v1328 = vld [vmem:[#allocation4 + $0x5c] sm:$0xf]
    %v1329 = vld [vmem:[#allocation4 + $0x60] sm:$0xf]
    %v1330 = vld [vmem:[#allocation4 + $0x64] sm:$0xf]
    %v1331 = vld [vmem:[#allocation4 + $0x68] sm:$0xf]
    %v1332 = vld [vmem:[#allocation4 + $0x6c] sm:$0xf]
    %v1333 = vld [vmem:[#allocation4 + $0x70] sm:$0xf]
    %v1334 = vld [vmem:[#allocation4 + $0x74] sm:$0xf]
    %v1335 = vld [vmem:[#allocation4 + $0x78] sm:$0xf]
    %v1336 = vld [vmem:[#allocation4 + $0x7c] sm:$0xf]
    %v1337 = vld [vmem:[#allocation4 + $0x80] sm:$0xf]
    %v1338 = vld [vmem:[#allocation4 + $0x84] sm:$0xf]
    %v1339 = vld [vmem:[#allocation4 + $0x88] sm:$0xf]
    %v1340 = vld [vmem:[#allocation4 + $0x8c] sm:$0xf]
    %v1341 = vld [vmem:[#allocation4 + $0x90] sm:$0xf]
    %v1342 = vld [vmem:[#allocation4 + $0x94] sm:$0xf]
    %v1343 = vld [vmem:[#allocation4 + $0x98] sm:$0xf]
    %v1344 = vld [vmem:[#allocation4 + $0x9c] sm:$0xf]
    %v1345 = vld [vmem:[#allocation4 + $0xa0] sm:$0xf]
    %v1346 = vld [vmem:[#allocation4 + $0xa4] sm:$0xf]
    %v1347 = vld [vmem:[#allocation4 + $0xa8] sm:$0xf]
    %v1348 = vld [vmem:[#allocation4 + $0xac] sm:$0xf]
    %v1349 = vld [vmem:[#allocation4 + $0xb0] sm:$0xf]
    %v1350 = vld [vmem:[#allocation4 + $0xb4] sm:$0xf]
    %v1351 = vld [vmem:[#allocation4 + $0xb8] sm:$0xf]
    %v1352 = vld [vmem:[#allocation4 + $0xbc] sm:$0xf]
    %v1353 = vld [vmem:[%s6] sm:$0x1]
    %v1354 = vld [vmem:[%s6 + $0x1] sm:$0x1]
    %v1355 = vld [vmem:[%s6 + $0x2] sm:$0x1]
    %v1356 = vlaneseq
    %v1357 = vshrl.u32 %v1356, 7
    %v1358 = vsub.s32 0, %v1357
    %v1359 = vrot.slane %v1353, %v1358
    %v1408 = vunpack.c.l.b16 %v1305
    %v1409 = vunpack.c.l.b16 %v1306
    %v1410 = vunpack.c.l.b16 %v1307
    %v1411 = vunpack.c.l.b16 %v1308
    %v1412 = vunpack.c.l.b16 %v1309
    %v1413 = vunpack.c.l.b16 %v1310
    %v1414 = vunpack.c.l.b16 %v1311
    %v1415 = vunpack.c.l.b16 %v1312
    %v1416 = vunpack.c.l.b16 %v1313
    %v1417 = vunpack.c.l.b16 %v1314
    %v1418 = vunpack.c.l.b16 %v1315
    %v1419 = vunpack.c.l.b16 %v1316
    %v1420 = vunpack.c.l.b16 %v1317
    %v1421 = vunpack.c.l.b16 %v1318
    %v1422 = vunpack.c.l.b16 %v1319
    %v1423 = vunpack.c.l.b16 %v1320
    %v1424 = vunpack.c.l.b16 %v1321
    %v1425 = vunpack.c.l.b16 %v1322
    %v1426 = vunpack.c.l.b16 %v1323
    %v1427 = vunpack.c.l.b16 %v1324
    %v1428 = vunpack.c.l.b16 %v1325
    %v1429 = vunpack.c.l.b16 %v1326
    %v1430 = vunpack.c.l.b16 %v1327
    %v1431 = vunpack.c.l.b16 %v1328
    %v1432 = vunpack.c.l.b16 %v1329
    %v1433 = vunpack.c.l.b16 %v1330
    %v1434 = vunpack.c.l.b16 %v1331
    %v1435 = vunpack.c.l.b16 %v1332
    %v1436 = vunpack.c.l.b16 %v1333
    %v1437 = vunpack.c.l.b16 %v1334
    %v1438 = vunpack.c.l.b16 %v1335
    %v1439 = vunpack.c.l.b16 %v1336
    %v1440 = vunpack.c.l.b16 %v1337
    %v1441 = vunpack.c.l.b16 %v1338
    %v1442 = vunpack.c.l.b16 %v1339
    %v1443 = vunpack.c.l.b16 %v1340
    %v1444 = vunpack.c.l.b16 %v1341
    %v1445 = vunpack.c.l.b16 %v1342
    %v1446 = vunpack.c.l.b16 %v1343
    %v1447 = vunpack.c.l.b16 %v1344
    %v1448 = vunpack.c.l.b16 %v1345
    %v1449 = vunpack.c.l.b16 %v1346
    %v1450 = vunpack.c.l.b16 %v1347
    %v1451 = vunpack.c.l.b16 %v1348
    %v1452 = vunpack.c.l.b16 %v1349
    %v1453 = vunpack.c.l.b16 %v1350
    %v1454 = vunpack.c.l.b16 %v1351
    %v1455 = vunpack.c.l.b16 %v1352
    %v1456 = vpack.c.b16 %v1409, %v1408
    %v1457 = vpack.c.b16 %v1411, %v1410
    %v1458 = vpack.c.b16 %v1413, %v1412
    %v1459 = vpack.c.b16 %v1415, %v1414
    %v1460 = vpack.c.b16 %v1417, %v1416
    %v1461 = vpack.c.b16 %v1419, %v1418
    %v1462 = vpack.c.b16 %v1421, %v1420
    %v1463 = vpack.c.b16 %v1423, %v1422
    %v1464 = vpack.c.b16 %v1425, %v1424
    %v1465 = vpack.c.b16 %v1427, %v1426
    %v1466 = vpack.c.b16 %v1429, %v1428
    %v1467 = vpack.c.b16 %v1431, %v1430
    %v1468 = vpack.c.b16 %v1433, %v1432
    %v1469 = vpack.c.b16 %v1435, %v1434
    %v1470 = vpack.c.b16 %v1437, %v1436
    %v1471 = vpack.c.b16 %v1439, %v1438
    %v1472 = vpack.c.b16 %v1441, %v1440
    %v1473 = vpack.c.b16 %v1443, %v1442
    %v1474 = vpack.c.b16 %v1445, %v1444
    %v1475 = vpack.c.b16 %v1447, %v1446
    %v1476 = vpack.c.b16 %v1449, %v1448
    %v1477 = vpack.c.b16 %v1451, %v1450
    %v1478 = vpack.c.b16 %v1453, %v1452
    %v1479 = vpack.c.b16 %v1455, %v1454
    %1504 = vmatprep.subr.bf16.mxu0 0
    %1505 = vmatpush1.bf16.msra.mxu0 %v1456
    %1506 = vmatprep.subr.bf16.mxu0 0
    %1507 = vmatpush1.bf16.msra.mxu0 %v1457
    %1508 = vmatprep.subr.bf16.mxu0 0
    %1509 = vmatpush1.bf16.msra.mxu0 %v1458
    %1510 = vmatprep.subr.bf16.mxu0 0
    %1511 = vmatpush1.bf16.msra.mxu0 %v1459
    %1512 = vmatprep.subr.bf16.mxu0 0
    %1513 = vmatpush1.bf16.msra.mxu0 %v1460
    %1514 = vmatprep.subr.bf16.mxu0 0
    %1515 = vmatpush1.bf16.msra.mxu0 %v1461
    %1516 = vmatprep.subr.bf16.mxu0 0
    %1517 = vmatpush1.bf16.msra.mxu0 %v1462
    %1518 = vmatprep.subr.bf16.mxu0 0
    %1519 = vmatpush1.bf16.msra.mxu0 %v1463
    %1520 = vmatprep.subr.bf16.mxu0 0
    %1521 = vmatpush1.bf16.msra.mxu0 %v1464
    %1522 = vmatprep.subr.bf16.mxu0 0
    %1523 = vmatpush1.bf16.msra.mxu0 %v1465
    %1524 = vmatprep.subr.bf16.mxu0 0
    %1525 = vmatpush1.bf16.msra.mxu0 %v1466
    %1526 = vmatprep.subr.bf16.mxu0 0
    %1527 = vmatpush1.bf16.msra.mxu0 %v1467
    %1528 = vmatprep.subr.bf16.mxu0 0
    %1529 = vmatpush1.bf16.msra.mxu0 %v1468
    %1530 = vmatprep.subr.bf16.mxu0 0
    %1531 = vmatpush1.bf16.msra.mxu0 %v1469
    %1532 = vmatprep.subr.bf16.mxu0 0
    %1533 = vmatpush1.bf16.msra.mxu0 %v1470
    %1534 = vmatprep.subr.bf16.mxu0 0
    %1535 = vmatpush1.bf16.msra.mxu0 %v1471
    %1536 = vmatprep.mubr.bf16.mxu0 %v1294
    %1537 = vmatmul.mubr.bf16.gmra.mrb[0].mxu0 %v1293
    %v1538 = vpop.f32.mrb[0].mxu0
    %v1539 = vadd.f32 %v1359, %v1538
    %v1540 = vpop.f32.mrb[0].mxu0
    %v1541 = vpop.f32.mrb[0].mxu0
    %v1542 = vadd.f32 %v1359, %v1541
    %v1543 = vpop.f32.mrb[0].mxu0
    %1544 = vmatprep.mubr.bf16.mxu0 %v1297
    %1545 = vmatmul.mubr.bf16.gmra.mrb[0].mxu0 %v1296
    %v1546 = vpop.f32.mrb[0].mxu0
    %v1547 = vadd.f32 %v1359, %v1546
    %v1548 = vpop.f32.mrb[0].mxu0
    %v1549 = vpop.f32.mrb[0].mxu0
    %v1550 = vadd.f32 %v1359, %v1549
    %v1551 = vpop.f32.mrb[0].mxu0
    %1552 = vmatprep.mubr.bf16.mxu0 %v1300
    %1553 = vmatmul.mubr.bf16.gmra.mrb[0].mxu0 %v1299
    %v1554 = vpop.f32.mrb[0].mxu0
    %v1555 = vadd.f32 %v1359, %v1554
    %v1556 = vpop.f32.mrb[0].mxu0
    %v1557 = vpop.f32.mrb[0].mxu0
    %v1558 = vadd.f32 %v1359, %v1557
    %v1559 = vpop.f32.mrb[0].mxu0
    %1560 = vmatprep.mubr.bf16.mxu0 %v1303
    %1561 = vmatmul.mubr.bf16.gmra.mrb[0].mxu0 %v1302
    %v1562 = vpop.f32.mrb[0].mxu0
    %v1563 = vadd.f32 %v1359, %v1562
    %v1564 = vpop.f32.mrb[0].mxu0
    %v1565 = vpop.f32.mrb[0].mxu0
    %v1566 = vadd.f32 %v1359, %v1565
    %v1567 = vpop.f32.mrb[0].mxu0
    %1568 = vdwg.mxu0
    %1569 = vmatprep.subr.bf16.mxu0 0
    %1570 = vmatpush1.bf16.msra.mxu0 %v1472
    %1571 = vmatprep.subr.bf16.mxu0 0
    %1572 = vmatpush1.bf16.msra.mxu0 %v1473
    %1573 = vmatprep.subr.bf16.mxu0 0
    %1574 = vmatpush1.bf16.msra.mxu0 %v1474
    %1575 = vmatprep.subr.bf16.mxu0 0
    %1576 = vmatpush1.bf16.msra.mxu0 %v1475
    %1577 = vmatprep.subr.bf16.mxu0 0
    %1578 = vmatpush1.bf16.msra.mxu0 %v1476
    %1579 = vmatprep.subr.bf16.mxu0 0
    %1580 = vmatpush1.bf16.msra.mxu0 %v1477
    %1581 = vmatprep.subr.bf16.mxu0 0
    %1582 = vmatpush1.bf16.msra.mxu0 %v1478
    %1583 = vmatprep.subr.bf16.mxu0 0
    %1584 = vmatpush1.bf16.msra.mxu0 %v1479
    %1585 = vmatprep.subr.bf16.mxu0 0
    %1586 = vmatpush1.bf16.msra.mxu0 0
    %1587 = vmatprep.subr.bf16.mxu0 0
    %1588 = vmatpush1.bf16.msra.mxu0 0
    %1589 = vmatprep.subr.bf16.mxu0 0
    %1590 = vmatpush1.bf16.msra.mxu0 0
    %1591 = vmatprep.subr.bf16.mxu0 0
    %1592 = vmatpush1.bf16.msra.mxu0 0
    %1593 = vmatprep.subr.bf16.mxu0 0
    %1594 = vmatpush1.bf16.msra.mxu0 0
    %1595 = vmatprep.subr.bf16.mxu0 0
    %1596 = vmatpush1.bf16.msra.mxu0 0
    %1597 = vmatprep.subr.bf16.mxu0 0
    %1598 = vmatpush1.bf16.msra.mxu0 0
    %1599 = vmatprep.subr.bf16.mxu0 0
    %1600 = vmatpush1.bf16.msra.mxu0 0
    %1601 = vmatprep.mubr.bf16.mxu0 0
    %1602 = vmatmul.mubr.bf16.gmra.mrb[0].mxu0 %v1295
    %v1603 = vpop.f32.mrb[0].mxu0
    %v1604 = vadd.f32 %v1539, %v1603
    %v1605 = vpop.f32.mrb[0].mxu0
    %v1606 = vpop.f32.mrb[0].mxu0
    %v1607 = vadd.f32 %v1542, %v1606
    %v1608 = vpop.f32.mrb[0].mxu0
    %1609 = vmatprep.mubr.bf16.mxu0 0
    %1610 = vmatmul.mubr.bf16.gmra.mrb[0].mxu0 %v1298
    %v1611 = vpop.f32.mrb[0].mxu0
    %v1612 = vadd.f32 %v1547, %v1611
    %v1613 = vpop.f32.mrb[0].mxu0
    %v1614 = vpop.f32.mrb[0].mxu0
    %v1615 = vadd.f32 %v1550, %v1614
    %v1616 = vpop.f32.mrb[0].mxu0
    %1617 = vmatprep.mubr.bf16.mxu0 0
    %1618 = vmatmul.mubr.bf16.gmra.mrb[0].mxu0 %v1301
    %v1619 = vpop.f32.mrb[0].mxu0
    %v1620 = vadd.f32 %v1555, %v1619
    %v1621 = vpop.f32.mrb[0].mxu0
    %v1622 = vpop.f32.mrb[0].mxu0
    %v1623 = vadd.f32 %v1558, %v1622
    %v1624 = vpop.f32.mrb[0].mxu0
    %1625 = vmatprep.mubr.bf16.mxu0 0
    %1626 = vmatmul.mubr.bf16.gmra.mrb[0].mxu0 %v1304
    %v1627 = vpop.f32.mrb[0].mxu0
    %v1628 = vadd.f32 %v1563, %v1627
    %v1629 = vpop.f32.mrb[0].mxu0
    %v1630 = vpop.f32.mrb[0].mxu0
    %v1631 = vadd.f32 %v1566, %v1630
    %v1632 = vpop.f32.mrb[0].mxu0
    %1633 = vdwg.mxu0
    %v1634 = vtanh.pop %v1604
    %v1635 = vtanh.pop %v1607
    %v1636 = vtanh.pop %v1612
    %v1637 = vtanh.pop %v1615
    %v1638 = vtanh.pop %v1620
    %v1639 = vtanh.pop %v1623
    %v1640 = vtanh.pop %v1628
    %v1641 = vtanh.pop %v1631
    %v1642 = vlaneseq
    %v1643 = vshrl.u32 %v1642, 7
    %v1644 = vsub.s32 0, %v1643
    %v1645 = vrot.slane %v1354, %v1644
    %v1646 = vmul.f32 %v1634, %v1645
    %v1647 = vmul.f32 %v1635, %v1645
    %v1648 = vmul.f32 %v1636, %v1645
    %v1649 = vmul.f32 %v1637, %v1645
    %v1650 = vmul.f32 %v1638, %v1645
    %v1651 = vmul.f32 %v1639, %v1645
    %v1652 = vmul.f32 %v1640, %v1645
    %v1653 = vmul.f32 %v1641, %v1645
    %v1654 = vlaneseq
    %v1655 = vshrl.u32 %v1654, 7
    %v1656 = vsub.s32 0, %v1655
    %v1657 = vrot.slane %v1355, %v1656
    %v1658 = vadd.f32 %v1646, %v1657
    %v1659 = vadd.f32 %v1647, %v1657
    %v1660 = vadd.f32 %v1648, %v1657
    %v1661 = vadd.f32 %v1649, %v1657
    %v1662 = vadd.f32 %v1650, %v1657
    %v1663 = vadd.f32 %v1651, %v1657
    %v1664 = vadd.f32 %v1652, %v1657
    %v1665 = vadd.f32 %v1653, %v1657
    %1666 = vst [vmem:[%s7] sm:$0xff] %v1658
    %1667 = vst [vmem:[%s7 + $0x8] sm:$0xff] %v1659
    %1668 = vst [vmem:[%s7 + $0x10] sm:$0xff] %v1660
    %1669 = vst [vmem:[%s7 + $0x18] sm:$0xff] %v1661
    %1670 = vst [vmem:[%s7 + $0x20] sm:$0xff] %v1662
    %1671 = vst [vmem:[%s7 + $0x28] sm:$0xff] %v1663
    %1672 = vst [vmem:[%s7 + $0x30] sm:$0xff] %v1664
    %1673 = vst [vmem:[%s7 + $0x38] sm:$0xff] %v1665
    // Predicated region
    $region38: #{actor_forward.1} parent=1 // pred_check
      _
    $region39: #{actor_forward.1} parent=1 // pred_check_branch
      %1675 = sbr.rel (0) target = $region41
    $region40: #{actor_forward.1} parent=1 // pred_region
      _
    $region41: #{actor_forward.1} parent=1 // pred_fallthru
      _
    // Predicated region
    $region42: #{actor_forward.1} parent=1 // pred_check
      _
    $region43: #{actor_forward.1} parent=1 // pred_check_branch
      %1677 = sbr.rel (0) target = $region45
    $region44: #{actor_forward.1} parent=1 // pred_region
      _
    $region45: #{actor_forward.1} parent=1 // pred_fallthru
      _
    %1678 = vsyncpa [#allocation3], 1
    %1679 = vsyncpa [#allocation5], 1

</llo_original>
